<compile_context>
chip_gen: v5e
topology: v5e:2x2
jax: 0.10.0
libtpu: 0.0.40
codegen_flags: <defaults>
</compile_context>

<pallas_src>
import math
import functools

import numpy as np
import jax
import jax.numpy as jnp
from jax.experimental import pallas as pl
from jax.experimental.pallas import tpu as pltpu


_MXU_DTYPE = jnp.bfloat16   # MXU operand dtype for the dense layers (f32 accumulation)


def _vmem_limit_bytes():
    # Generation-aware scoped-VMEM budget: ~3/4 of physical VMEM per core
    # (=> ~48 MiB on v7x (64 MiB), ~96 MiB on v5e/v6e (128 MiB)).
    try:
        cap = int(pltpu.get_tpu_info().vmem_capacity_bytes)
    except Exception:
        cap = 64 * 1024 * 1024   # conservative fallback (v7x per-core VMEM)
    return min(int(cap * 3 // 4), 110 * 1024 * 1024)


_VMEM_LIMIT = _vmem_limit_bytes()


# ----------------------------- helpers -----------------------------

def _choose_tile(m, max_tile=1024):
    """Largest row tile <= max_tile dividing m (whole array if it already fits)."""
    if m <= max_tile:
        return m
    for t in (1024, 512, 256, 128, 64, 32, 16, 8):
        if t <= max_tile and m % t == 0:
            return t
    return m


def _erf(x):
    # float32-accurate erf (Abramowitz & Stegun 7.1.26, |err| < 1.5e-7), built only
    # from ops guaranteed to lower in Mosaic (exp / mul / add / where).
    # TODO(synk): switch to jax.lax.erf in-kernel once its Mosaic lowering is confirmed.
    a1, a2, a3, a4, a5 = (0.254829592, -0.284496736, 1.421413741,
                          -1.453152027, 1.061405429)
    p = 0.3275911
    s = jnp.where(x >= 0.0, 1.0, -1.0)
    z = jnp.abs(x)
    t = 1.0 / (1.0 + p * z)
    poly = ((((a5 * t + a4) * t + a3) * t + a2) * t + a1) * t
    return s * (1.0 - poly * jnp.exp(-z * z))


def _gelu_exact(x):
    # matches torch.nn.GELU() (erf form) to float32 precision
    return 0.5 * x * (1.0 + _erf(x * (1.0 / math.sqrt(2.0))))


def _layernorm(x, gamma, beta):
    mean = jnp.mean(x, axis=-1, keepdims=True)
    var = jnp.mean((x - mean) ** 2, axis=-1, keepdims=True)
    return (x - mean) * jax.lax.rsqrt(var + 1e-5) * gamma + beta   # PyTorch eps


def _dft_matrices(L):
    idx = np.arange(L)
    ang = 2.0 * np.pi * np.outer(idx, idx) / L
    return (jnp.asarray(np.cos(ang), jnp.float32),
            jnp.asarray(np.sin(ang), jnp.float32))


# ----------------------------- Pallas kernels -----------------------------

def _ln_matmul_kernel(x_ref, g_ref, b_ref, w_ref, bias_ref, o_ref):
    # o = LayerNorm(x) @ W + bias   (row tile; W is bf16, f32 accumulation)
    h = _layernorm(x_ref[...], g_ref[...], b_ref[...])
    o_ref[...] = (jnp.dot(h.astype(_MXU_DTYPE), w_ref[...],
                          preferred_element_type=jnp.float32)
                  + bias_ref[...])


def _corr_mean_kernel(qkv_ref, cos_ref, sin_ref, o_ref):
    # Per-batch circular cross-correlation (== irfft(rfft(q)*conj(rfft(k)))),
    # reduced over channels in-VMEM.  Channel lives on the lane axis; the
    # DFT matrices sit on the LEFT so the contraction runs over time.
    #   qkv_ref: (L, 3C) with columns [q | k | v];  cos/sin: (L, L);  o_ref: (L, 1)
    L, three_c = qkv_ref.shape
    C = three_c // 3
    qk = qkv_ref[:, :2 * C]                                     # contiguous [q | k]
    cos, sin = cos_ref[...], sin_ref[...]
    # forward DFT over time: 2 matmuls of width 2C (instead of 4 of width C)
    spec_c = jnp.dot(cos, qk, preferred_element_type=jnp.float32)   # (L, 2C)
    spec_s = jnp.dot(sin, qk, preferred_element_type=jnp.float32)
    qc, kc = spec_c[:, :C], spec_c[:, C:]
    qs, ks = spec_s[:, :C], spec_s[:, C:]
    res_r = qc * kc + qs * ks            # Re(Q * conj(K))
    res_i = qc * ks - qs * kc            # Im(Q * conj(K))
    # inverse DFT + channel mean; only the (L,1) mean ever leaves VMEM
    corr = (jnp.dot(cos, res_r, preferred_element_type=jnp.float32)
            - jnp.dot(sin, res_i, preferred_element_type=jnp.float32))
    o_ref[...] = jnp.sum(corr, axis=1, keepdims=True) * (1.0 / (L * C))


def _delay_agg_kernel(a_ref, qkv_ref, o_ref):
    # delays_agg[t, c] = sum_d w[d] * v[(t+d) % L, c]  ==  (A @ v)[t, c]
    # with the circulant A[t, s] = w[(s - t) % L]; v = third C-wide slab of qkv.
    # Kept in f32: the contraction (L) is small and this is the values path.
    C = qkv_ref.shape[1] // 3
    v = qkv_ref[:, 2 * C:]
    o_ref[...] = jnp.dot(a_ref[...], v, preferred_element_type=jnp.float32)


def _proj_residual_kernel(v_ref, res_ref, w_ref, b_ref, o_ref):
    # o = residual + V @ Wproj + bproj   (row tile; bf16 MXU operands)
    o_ref[...] = (res_ref[...]
                  + jnp.dot(v_ref[...].astype(_MXU_DTYPE), w_ref[...],
                            preferred_element_type=jnp.float32)
                  + b_ref[...])


def _ln_mlp_residual_kernel(x_ref, g_ref, b_ref, w1_ref, b1_ref,
                            w2_ref, b2_ref, o_ref):
    # o = x + fc2(GELU(fc1(LayerNorm(x))))   (row tile; (tm,4C) stays in VMEM/vregs)
    x = x_ref[...]
    h = _layernorm(x, g_ref[...], b_ref[...])
    h = jnp.dot(h.astype(_MXU_DTYPE), w1_ref[...],
                preferred_element_type=jnp.float32) + b1_ref[...]
    h = _gelu_exact(h)
    h = jnp.dot(h.astype(_MXU_DTYPE), w2_ref[...],
                preferred_element_type=jnp.float32) + b2_ref[...]
    o_ref[...] = x + h


# ----------------------------- Pallas wrappers -----------------------------
# TODO(synk): single-buffer the constant weight/DFT blocks
# (pipeline_mode=pl.Buffered(1)) once verified on the deployed JAX version;
# they never change across the grid so default double-buffering wastes VMEM.

def ln_matmul(x2d, gamma, beta, w, bias):
    M, C = x2d.shape
    Cout = w.shape[1]
    tm = _choose_tile(M)
    cost = pl.CostEstimate(
        flops=int(2 * M * C * Cout + 10 * M * C), transcendentals=0,
        bytes_accessed=int(4 * (M * C + 2 * C + Cout + M * Cout) + 2 * C * Cout))
    return pl.pallas_call(
        _ln_matmul_kernel,
        out_shape=jax.ShapeDtypeStruct((M, Cout), jnp.float32),
        grid=(M // tm,),
        in_specs=[pl.BlockSpec((tm, C), lambda i: (i, 0)),
                  pl.BlockSpec((1, C), lambda i: (0, 0)),
                  pl.BlockSpec((1, C), lambda i: (0, 0)),
                  pl.BlockSpec((C, Cout), lambda i: (0, 0)),
                  pl.BlockSpec((1, Cout), lambda i: (0, 0))],
        out_specs=pl.BlockSpec((tm, Cout), lambda i: (i, 0)),
        compiler_params=pltpu.CompilerParams(
            dimension_semantics=("parallel",), vmem_limit_bytes=_VMEM_LIMIT),
        cost_estimate=cost,
    )(x2d, gamma.reshape(1, C), beta.reshape(1, C), w, bias.reshape(1, Cout))


def corr_channel_mean(qkv_b, cos_m, sin_m):
    # qkv_b: (B, L, 3C) f32 -> mean-over-channel correlation (B, L) f32.
    B, L, three_c = qkv_b.shape
    C = three_c // 3
    cost = pl.CostEstimate(
        flops=int(B * (12 * C * L * L + 8 * L * C)), transcendentals=0,
        bytes_accessed=int(4 * (B * L * three_c + 2 * L * L + B * L)))
    out = pl.pallas_call(
        _corr_mean_kernel,
        out_shape=jax.ShapeDtypeStruct((B, L, 1), jnp.float32),
        grid=(B,),
        in_specs=[pl.BlockSpec((None, L, three_c), lambda b: (b, 0, 0)),
                  pl.BlockSpec((L, L), lambda b: (0, 0)),
                  pl.BlockSpec((L, L), lambda b: (0, 0))],
        out_specs=pl.BlockSpec((None, L, 1), lambda b: (b, 0, 0)),
        compiler_params=pltpu.CompilerParams(
            dimension_semantics=("parallel",), vmem_limit_bytes=_VMEM_LIMIT),
        cost_estimate=cost,
    )(qkv_b, cos_m, sin_m)
    return out[:, :, 0]                                          # (B, L)


def time_delay_aggregate(a_circ, qkv_b):
    # a_circ: (B, L, L) circulant top-k weights; qkv_b: (B, L, 3C). Returns (B, L, C).
    B, L, three_c = qkv_b.shape
    C = three_c // 3
    cost = pl.CostEstimate(
        flops=int(2 * B * L * L * C), transcendentals=0,
        bytes_accessed=int(4 * (B * L * L + B * L * three_c + B * L * C)))
    return pl.pallas_call(
        _delay_agg_kernel,
        out_shape=jax.ShapeDtypeStruct((B, L, C), jnp.float32),
        grid=(B,),
        in_specs=[pl.BlockSpec((None, L, L), lambda b: (b, 0, 0)),
                  pl.BlockSpec((None, L, three_c), lambda b: (b, 0, 0))],
        out_specs=pl.BlockSpec((None, L, C), lambda b: (b, 0, 0)),
        compiler_params=pltpu.CompilerParams(
            dimension_semantics=("parallel",), vmem_limit_bytes=_VMEM_LIMIT),
        cost_estimate=cost,
    )(a_circ, qkv_b)


def proj_residual(v2d, res2d, w, bias):
    M, C = v2d.shape
    Cout = w.shape[1]
    tm = _choose_tile(M)
    cost = pl.CostEstimate(
        flops=int(2 * M * C * Cout + 2 * M * Cout), transcendentals=0,
        bytes_accessed=int(4 * (2 * M * C + Cout + M * Cout) + 2 * C * Cout))
    return pl.pallas_call(
        _proj_residual_kernel,
        out_shape=jax.ShapeDtypeStruct((M, Cout), jnp.float32),
        grid=(M // tm,),
        in_specs=[pl.BlockSpec((tm, C), lambda i: (i, 0)),
                  pl.BlockSpec((tm, C), lambda i: (i, 0)),
                  pl.BlockSpec((C, Cout), lambda i: (0, 0)),
                  pl.BlockSpec((1, Cout), lambda i: (0, 0))],
        out_specs=pl.BlockSpec((tm, Cout), lambda i: (i, 0)),
        compiler_params=pltpu.CompilerParams(
            dimension_semantics=("parallel",), vmem_limit_bytes=_VMEM_LIMIT),
        cost_estimate=cost,
    )(v2d, res2d, w, bias.reshape(1, Cout))


def ln_mlp_residual(x2d, gamma, beta, w1, b1, w2, b2):
    M, C = x2d.shape
    Chid = w1.shape[1]
    # Per-kernel tile cap: the live f32 intermediate here is (tm, 4C), 4x wider
    # than the other kernels'.
    # TODO(synk): K-tile Chid (reduction grid axis + f32 VMEM accumulator) for
    # production C on v7x instead of only capping tm.
    tm = _choose_tile(M, max_tile=256)
    cost = pl.CostEstimate(
        flops=int(4 * M * C * Chid + 20 * M * Chid + 10 * M * C),
        transcendentals=int(M * Chid),
        bytes_accessed=int(4 * (2 * M * C + Chid + 3 * C) + 2 * 2 * C * Chid))
    return pl.pallas_call(
        _ln_mlp_residual_kernel,
        out_shape=jax.ShapeDtypeStruct((M, C), jnp.float32),
        grid=(M // tm,),
        in_specs=[pl.BlockSpec((tm, C), lambda i: (i, 0)),
                  pl.BlockSpec((1, C), lambda i: (0, 0)),
                  pl.BlockSpec((1, C), lambda i: (0, 0)),
                  pl.BlockSpec((C, Chid), lambda i: (0, 0)),
                  pl.BlockSpec((1, Chid), lambda i: (0, 0)),
                  pl.BlockSpec((Chid, C), lambda i: (0, 0)),
                  pl.BlockSpec((1, C), lambda i: (0, 0))],
        out_specs=pl.BlockSpec((tm, C), lambda i: (i, 0)),
        compiler_params=pltpu.CompilerParams(
            dimension_semantics=("parallel",), vmem_limit_bytes=_VMEM_LIMIT),
        cost_estimate=cost,
    )(x2d, gamma.reshape(1, C), beta.reshape(1, C),
      w1, b1.reshape(1, Chid), w2, b2.reshape(1, C))


# ----------------------------- model forward -----------------------------

def block_forward(x, params, n_head, factor=5):
    B, T, C = x.shape
    H = n_head
    E = C // H
    L = T
    x2d = x.reshape(B * T, C)

    # ---- attention: LN1 fused with the concatenated QKV projection ----
    qkv = ln_matmul(x2d, params["ln1_g"], params["ln1_b"],
                    params["w_qkv"], params["b_qkv"])              # (B*T, 3C) f32
    qkv_b = qkv.reshape(B, T, 3 * C)                               # no transposes

    # ---- (1) period-based dependency discovery, reduced over channels in-kernel ----
    mean_value = corr_channel_mean(qkv_b, params["dft_cos"],
                                   params["dft_sin"])              # (B, L)

    # ---- (2) time-delay aggregation (inference path, config.retrain == False) ----
    top_k = int(factor * math.log(L))
    weights, delay = jax.lax.top_k(mean_value, top_k)              # (B, top_k)
    tmp_corr = jax.nn.softmax(weights, axis=-1)                    # (B, top_k)
    # dense per-delay weights (zero at non-top-k delays) -> circulant A[t,s]=w[(s-t)%L]
    # TODO(synk): build the circulant in-kernel from w_full (strided pltpu.roll) to
    # avoid materializing (B, L, L) in XLA at large L.
    w_full = jnp.zeros((B, L), jnp.float32).at[
        jnp.arange(B)[:, None], delay].set(tmp_corr)               # (B, L)
    t_idx = jnp.arange(L)
    idx = (t_idx[None, :] - t_idx[:, None]) % L                    # idx[t, s] = (s-t)%L
    a_circ = w_full[:, idx]                                        # (B, L, L)

    agg = time_delay_aggregate(a_circ, qkv_b)                      # (B, L, C), lane-dense

    # spec-mandated scramble (PyTorch: permute(0,3,1,2).transpose(1,2).view(B,T,C)):
    # (B, L, H, E) -> (B, H, L, E) -> (B*T, C)
    V2d = agg.reshape(B, L, H, E).transpose(0, 2, 1, 3).reshape(B * T, C)

    # ---- output projection + residual (fused; resid dropout = identity) ----
    x_attn = proj_residual(V2d, x2d, params["w_proj"], params["b_proj"])   # (B*T, C)

    # ---- LN2 + MLP (fc1 -> exact GELU -> fc2) + residual, fully fused ----
    out = ln_mlp_residual(x_attn,
                          params["ln2_g"], params["ln2_b"],
                          params["w_fc1"], params["b_fc1"],
                          params["w_fc2"], params["b_fc2"])
    return out.reshape(B, T, C)


# ----------------------------- params & main -----------------------------

def init_params(key, n_embd, block_size):
    ks = jax.random.split(key, 6)

    def lin(k, cin, cout):
        kw, kb = jax.random.split(k)
        w = 0.02 * jax.random.normal(kw, (cin, cout), jnp.float32)
        b = 0.02 * jax.random.normal(kb, (cout,), jnp.float32)
        return w, b

    wq, bq = lin(ks[0], n_embd, n_embd)
    wk, bk = lin(ks[1], n_embd, n_embd)
    wv, bv = lin(ks[2], n_embd, n_embd)
    wp, bp = lin(ks[3], n_embd, n_embd)
    w1, b1 = lin(ks[4], n_embd, 4 * n_embd)
    w2, b2 = lin(ks[5], 4 * n_embd, n_embd)

    p = {}
    # MXU-facing weights stored in bf16 (halves HBM->VMEM DMA and hits the bf16
    # MXU path on v6e/v7x); biases / LN params / DFT matrices stay f32.
    p["w_qkv"] = jnp.concatenate([wq, wk, wv], axis=1).astype(_MXU_DTYPE)  # (C, 3C)
    p["b_qkv"] = jnp.concatenate([bq, bk, bv], axis=0)                     # (3C,)
    p["w_proj"], p["b_proj"] = wp.astype(_MXU_DTYPE), bp
    p["w_fc1"], p["b_fc1"] = w1.astype(_MXU_DTYPE), b1
    p["w_fc2"], p["b_fc2"] = w2.astype(_MXU_DTYPE), b2
    # PyTorch LayerNorm default init: weight = 1, bias = 0
    p["ln1_g"] = jnp.ones((n_embd,), jnp.float32)
    p["ln1_b"] = jnp.zeros((n_embd,), jnp.float32)
    p["ln2_g"] = jnp.ones((n_embd,), jnp.float32)
    p["ln2_b"] = jnp.zeros((n_embd,), jnp.float32)
    # DFT matrices (f32 — the correlation path is precision-sensitive)
    p["dft_cos"], p["dft_sin"] = _dft_matrices(block_size)
    return p


if __name__ == "__main__":
    B, T, C, H = 2, 16, 32, 4   # n_embd=32, n_head=4, head_dim=8, top_k=int(5*ln16)=13
    key = jax.random.PRNGKey(0)
    kx, kp = jax.random.split(key)
    x = jax.random.normal(kx, (B, T, C), jnp.float32)
    params = init_params(kp, C, T)

    fwd = jax.jit(functools.partial(block_forward, n_head=H))
    out = jax.block_until_ready(fwd(x, params))

    assert out.shape == (B, T, C)
    assert bool(jnp.all(jnp.isfinite(out)))
    print("KERNEL_OK")
</pallas_src>

<mosaic_0001>
module attributes {stable_mosaic.version = 11 : i64} {
  func.func @_corr_mean_kernel(%arg0: i32, %arg1: memref<1x16x96xf32, #tpu.memory_space<vmem>>, %arg2: memref<16x16xf32, #tpu.memory_space<vmem>>, %arg3: memref<16x16xf32, #tpu.memory_space<vmem>>, %arg4: memref<1x16x1xf32, #tpu.memory_space<vmem>>) attributes {dimension_semantics = [#tpu.dimension_semantics<parallel>], iteration_bounds = array<i64: 2>, scalar_prefetch = 0 : i64, scratch_operands = 0 : i64, tpu.core_type = #tpu.core_type<tc>, window_params = [{transform_indices = @transform_0, window_bounds = array<i64: 1, 16, 96>}, {pipeline_mode = #tpu.pipeline_mode<synchronous>, transform_indices = @transform_1, window_bounds = array<i64: 16, 16>}, {pipeline_mode = #tpu.pipeline_mode<synchronous>, transform_indices = @transform_2, window_bounds = array<i64: 16, 16>}, {transform_indices = @transform_3, window_bounds = array<i64: 1, 16, 1>}]} {
    %c0 = arith.constant 0 : index
    %c0_0 = arith.constant 0 : index
    %c0_1 = arith.constant 0 : index
    %0 = vector.load %arg1[%c0, %c0_0, %c0_1] : memref<1x16x96xf32, #tpu.memory_space<vmem>>, vector<1x16x64xf32>
    %1 = vector.shape_cast %0 : vector<1x16x64xf32> to vector<16x64xf32>
    %c0_2 = arith.constant 0 : index
    %c0_3 = arith.constant 0 : index
    %2 = vector.load %arg2[%c0_2, %c0_3] : memref<16x16xf32, #tpu.memory_space<vmem>>, vector<16x16xf32>
    %c0_4 = arith.constant 0 : index
    %c0_5 = arith.constant 0 : index
    %3 = vector.load %arg3[%c0_4, %c0_5] : memref<16x16xf32, #tpu.memory_space<vmem>>, vector<16x16xf32>
    %cst = arith.constant dense<0.000000e+00> : vector<16x64xf32>
    %4 = tpu.matmul %2, %1, %cst {dimension_numbers = #tpu.dot_dimension_numbers<[1], [0], [0], [1], [0, 0, 1, 1], [], []>} : vector<16x16xf32>, vector<16x64xf32>, vector<16x64xf32> -> vector<16x64xf32>
    %cst_6 = arith.constant dense<0.000000e+00> : vector<16x64xf32>
    %5 = tpu.matmul %3, %1, %cst_6 {dimension_numbers = #tpu.dot_dimension_numbers<[1], [0], [0], [1], [0, 0, 1, 1], [], []>} : vector<16x16xf32>, vector<16x64xf32>, vector<16x64xf32> -> vector<16x64xf32>
    %6 = vector.extract_strided_slice %4 {offsets = [0, 0], sizes = [16, 32], strides = [1, 1]} : vector<16x64xf32> to vector<16x32xf32>
    %7 = vector.extract_strided_slice %4 {offsets = [0, 32], sizes = [16, 32], strides = [1, 1]} : vector<16x64xf32> to vector<16x32xf32>
    %8 = vector.extract_strided_slice %5 {offsets = [0, 0], sizes = [16, 32], strides = [1, 1]} : vector<16x64xf32> to vector<16x32xf32>
    %9 = vector.extract_strided_slice %5 {offsets = [0, 32], sizes = [16, 32], strides = [1, 1]} : vector<16x64xf32> to vector<16x32xf32>
    %10 = arith.mulf %6, %7 : vector<16x32xf32>
    %11 = arith.mulf %8, %9 : vector<16x32xf32>
    %12 = arith.addf %10, %11 : vector<16x32xf32>
    %13 = arith.mulf %6, %9 : vector<16x32xf32>
    %14 = arith.mulf %8, %7 : vector<16x32xf32>
    %15 = arith.subf %13, %14 : vector<16x32xf32>
    %cst_7 = arith.constant dense<0.000000e+00> : vector<16x32xf32>
    %16 = tpu.matmul %2, %12, %cst_7 {dimension_numbers = #tpu.dot_dimension_numbers<[1], [0], [0], [1], [0, 0, 1, 1], [], []>} : vector<16x16xf32>, vector<16x32xf32>, vector<16x32xf32> -> vector<16x32xf32>
    %cst_8 = arith.constant dense<0.000000e+00> : vector<16x32xf32>
    %17 = tpu.matmul %3, %15, %cst_8 {dimension_numbers = #tpu.dot_dimension_numbers<[1], [0], [0], [1], [0, 0, 1, 1], [], []>} : vector<16x16xf32>, vector<16x32xf32>, vector<16x32xf32> -> vector<16x32xf32>
    %18 = arith.subf %16, %17 : vector<16x32xf32>
    %cst_9 = arith.constant dense<0.000000e+00> : vector<16xf32>
    %19 = vector.multi_reduction <add>, %18, %cst_9 [1] : vector<16x32xf32> to vector<16xf32>
    %20 = vector.shape_cast %19 : vector<16xf32> to vector<16x1xf32>
    %cst_10 = arith.constant 0.001953125 : f32
    %21 = vector.broadcast %cst_10 : f32 to vector<16x1xf32>
    %22 = arith.mulf %20, %21 : vector<16x1xf32>
    %c0_11 = arith.constant 0 : index
    %c0_12 = arith.constant 0 : index
    %c0_13 = arith.constant 0 : index
    %23 = vector.load %arg4[%c0_11, %c0_12, %c0_13] : memref<1x16x1xf32, #tpu.memory_space<vmem>>, vector<1x16x1xf32>
    %24 = vector.shape_cast %23 : vector<1x16x1xf32> to vector<16x1xf32>
    %25 = vector.shape_cast %22 : vector<16x1xf32> to vector<1x16x1xf32>
    tpu.vector_store %arg4[%c0_11, %c0_12, %c0_13], %25 {strides = array<i32>} : memref<1x16x1xf32, #tpu.memory_space<vmem>>, vector<1x16x1xf32>,
    return
  }
  func.func @transform_0(%arg0: i32) -> (i32, i32, i32) {
    %c0_i32 = arith.constant 0 : i32
    %c0_i32_0 = arith.constant 0 : i32
    %c0_i32_1 = arith.constant 0 : i32
    return %arg0, %c0_i32, %c0_i32_0 : i32, i32, i32
  }
  func.func @transform_1(%arg0: i32) -> (i32, i32) {
    %c0_i32 = arith.constant 0 : i32
    %c0_i32_0 = arith.constant 0 : i32
    %c0_i32_1 = arith.constant 0 : i32
    return %c0_i32, %c0_i32_0 : i32, i32
  }
  func.func @transform_2(%arg0: i32) -> (i32, i32) {
    %c0_i32 = arith.constant 0 : i32
    %c0_i32_0 = arith.constant 0 : i32
    %c0_i32_1 = arith.constant 0 : i32
    return %c0_i32, %c0_i32_0 : i32, i32
  }
  func.func @transform_3(%arg0: i32) -> (i32, i32, i32) {
    %c0_i32 = arith.constant 0 : i32
    %c0_i32_0 = arith.constant 0 : i32
    %c0_i32_1 = arith.constant 0 : i32
    return %arg0, %c0_i32, %c0_i32_0 : i32, i32, i32
  }
}

module attributes {stable_mosaic.version = 11 : i64} {
  func.func @_ln_matmul_kernel(%arg0: i32, %arg1: memref<32x32xf32, #tpu.memory_space<vmem>>, %arg2: memref<1x32xf32, #tpu.memory_space<vmem>>, %arg3: memref<1x32xf32, #tpu.memory_space<vmem>>, %arg4: memref<32x96xbf16, #tpu.memory_space<vmem>>, %arg5: memref<1x96xf32, #tpu.memory_space<vmem>>, %arg6: memref<32x96xf32, #tpu.memory_space<vmem>>) attributes {dimension_semantics = [#tpu.dimension_semantics<parallel>], iteration_bounds = array<i64: 1>, scalar_prefetch = 0 : i64, scratch_operands = 0 : i64, tpu.core_type = #tpu.core_type<tc>, window_params = [{transform_indices = @transform_0, window_bounds = array<i64: 32, 32>}, {pipeline_mode = #tpu.pipeline_mode<synchronous>, transform_indices = @transform_1, window_bounds = array<i64: 1, 32>}, {pipeline_mode = #tpu.pipeline_mode<synchronous>, transform_indices = @transform_2, window_bounds = array<i64: 1, 32>}, {pipeline_mode = #tpu.pipeline_mode<synchronous>, transform_indices = @transform_3, window_bounds = array<i64: 32, 96>}, {pipeline_mode = #tpu.pipeline_mode<synchronous>, transform_indices = @transform_4, window_bounds = array<i64: 1, 96>}, {transform_indices = @transform_5, window_bounds = array<i64: 32, 96>}]} {
    %c0 = arith.constant 0 : index
    %c0_0 = arith.constant 0 : index
    %0 = vector.load %arg1[%c0, %c0_0] : memref<32x32xf32, #tpu.memory_space<vmem>>, vector<32x32xf32>
    %c0_1 = arith.constant 0 : index
    %c0_2 = arith.constant 0 : index
    %1 = vector.load %arg2[%c0_1, %c0_2] : memref<1x32xf32, #tpu.memory_space<vmem>>, vector<1x32xf32>
    %c0_3 = arith.constant 0 : index
    %c0_4 = arith.constant 0 : index
    %2 = vector.load %arg3[%c0_3, %c0_4] : memref<1x32xf32, #tpu.memory_space<vmem>>, vector<1x32xf32>
    %cst = arith.constant dense<0.000000e+00> : vector<32xf32>
    %3 = vector.multi_reduction <add>, %0, %cst [1] : vector<32x32xf32> to vector<32xf32>
    %4 = vector.shape_cast %3 : vector<32xf32> to vector<32x1xf32>
    %cst_5 = arith.constant 3.200000e+01 : f32
    %5 = vector.broadcast %cst_5 : f32 to vector<32x1xf32>
    %6 = arith.divf %4, %5 : vector<32x1xf32>
    %7 = vector.broadcast %6 : vector<32x1xf32> to vector<32x32xf32>
    %8 = arith.subf %0, %7 : vector<32x32xf32>
    %9 = arith.mulf %8, %8 : vector<32x32xf32>
    %cst_6 = arith.constant dense<0.000000e+00> : vector<32xf32>
    %10 = vector.multi_reduction <add>, %9, %cst_6 [1] : vector<32x32xf32> to vector<32xf32>
    %11 = vector.shape_cast %10 : vector<32xf32> to vector<32x1xf32>
    %cst_7 = arith.constant 3.200000e+01 : f32
    %12 = vector.broadcast %cst_7 : f32 to vector<32x1xf32>
    %13 = arith.divf %11, %12 : vector<32x1xf32>
    %14 = vector.broadcast %6 : vector<32x1xf32> to vector<32x32xf32>
    %15 = arith.subf %0, %14 : vector<32x32xf32>
    %cst_8 = arith.constant 9.99999974E-6 : f32
    %16 = vector.broadcast %cst_8 : f32 to vector<32x1xf32>
    %17 = arith.addf %13, %16 : vector<32x1xf32>
    %18 = math.rsqrt %17 : vector<32x1xf32>
    %19 = vector.broadcast %18 : vector<32x1xf32> to vector<32x32xf32>
    %20 = arith.mulf %15, %19 : vector<32x32xf32>
    %21 = vector.broadcast %1 : vector<1x32xf32> to vector<32x32xf32>
    %22 = arith.mulf %20, %21 : vector<32x32xf32>
    %23 = vector.broadcast %2 : vector<1x32xf32> to vector<32x32xf32>
    %24 = arith.addf %22, %23 : vector<32x32xf32>
    %25 = arith.truncf %24 : vector<32x32xf32> to vector<32x32xbf16>
    %c0_9 = arith.constant 0 : index
    %c0_10 = arith.constant 0 : index
    %26 = vector.load %arg4[%c0_9, %c0_10] : memref<32x96xbf16, #tpu.memory_space<vmem>>, vector<32x96xbf16>
    %cst_11 = arith.constant dense<0.000000e+00> : vector<32x96xf32>
    %27 = tpu.matmul %25, %26, %cst_11 {dimension_numbers = #tpu.dot_dimension_numbers<[1], [0], [0], [1], [0, 0, 1, 1], [], []>} : vector<32x32xbf16>, vector<32x96xbf16>, vector<32x96xf32> -> vector<32x96xf32>
    %c0_12 = arith.constant 0 : index
    %c0_13 = arith.constant 0 : index
    %28 = vector.load %arg5[%c0_12, %c0_13] : memref<1x96xf32, #tpu.memory_space<vmem>>, vector<1x96xf32>
    %29 = vector.broadcast %28 : vector<1x96xf32> to vector<32x96xf32>
    %30 = arith.addf %27, %29 : vector<32x96xf32>
    %c0_14 = arith.constant 0 : index
    %c0_15 = arith.constant 0 : index
    %31 = vector.load %arg6[%c0_14, %c0_15] : memref<32x96xf32, #tpu.memory_space<vmem>>, vector<32x96xf32>
    tpu.vector_store %arg6[%c0_14, %c0_15], %30 {strides = array<i32>} : memref<32x96xf32, #tpu.memory_space<vmem>>, vector<32x96xf32>,
    return
  }
  func.func @transform_0(%arg0: i32) -> (i32, i32) {
    %c0_i32 = arith.constant 0 : i32
    %c0_i32_0 = arith.constant 0 : i32
    return %arg0, %c0_i32 : i32, i32
  }
  func.func @transform_1(%arg0: i32) -> (i32, i32) {
    %c0_i32 = arith.constant 0 : i32
    %c0_i32_0 = arith.constant 0 : i32
    %c0_i32_1 = arith.constant 0 : i32
    return %c0_i32, %c0_i32_0 : i32, i32
  }
  func.func @transform_2(%arg0: i32) -> (i32, i32) {
    %c0_i32 = arith.constant 0 : i32
    %c0_i32_0 = arith.constant 0 : i32
    %c0_i32_1 = arith.constant 0 : i32
    return %c0_i32, %c0_i32_0 : i32, i32
  }
  func.func @transform_3(%arg0: i32) -> (i32, i32) {
    %c0_i32 = arith.constant 0 : i32
    %c0_i32_0 = arith.constant 0 : i32
    %c0_i32_1 = arith.constant 0 : i32
    return %c0_i32, %c0_i32_0 : i32, i32
  }
  func.func @transform_4(%arg0: i32) -> (i32, i32) {
    %c0_i32 = arith.constant 0 : i32
    %c0_i32_0 = arith.constant 0 : i32
    %c0_i32_1 = arith.constant 0 : i32
    return %c0_i32, %c0_i32_0 : i32, i32
  }
  func.func @transform_5(%arg0: i32) -> (i32, i32) {
    %c0_i32 = arith.constant 0 : i32
    %c0_i32_0 = arith.constant 0 : i32
    return %arg0, %c0_i32 : i32, i32
  }
}

module attributes {stable_mosaic.version = 11 : i64} {
  func.func @_delay_agg_kernel(%arg0: i32, %arg1: memref<1x16x16xf32, #tpu.memory_space<vmem>>, %arg2: memref<1x16x96xf32, #tpu.memory_space<vmem>>, %arg3: memref<1x16x32xf32, #tpu.memory_space<vmem>>) attributes {dimension_semantics = [#tpu.dimension_semantics<parallel>], iteration_bounds = array<i64: 2>, scalar_prefetch = 0 : i64, scratch_operands = 0 : i64, tpu.core_type = #tpu.core_type<tc>, window_params = [{transform_indices = @transform_0, window_bounds = array<i64: 1, 16, 16>}, {transform_indices = @transform_1, window_bounds = array<i64: 1, 16, 96>}, {transform_indices = @transform_2, window_bounds = array<i64: 1, 16, 32>}]} {
    %c0 = arith.constant 0 : index
    %c0_0 = arith.constant 0 : index
    %c64 = arith.constant 64 : index
    %0 = vector.load %arg2[%c0, %c0_0, %c64] : memref<1x16x96xf32, #tpu.memory_space<vmem>>, vector<1x16x32xf32>
    %1 = vector.shape_cast %0 : vector<1x16x32xf32> to vector<16x32xf32>
    %c0_1 = arith.constant 0 : index
    %c0_2 = arith.constant 0 : index
    %c0_3 = arith.constant 0 : index
    %2 = vector.load %arg1[%c0_1, %c0_2, %c0_3] : memref<1x16x16xf32, #tpu.memory_space<vmem>>, vector<1x16x16xf32>
    %3 = vector.shape_cast %2 : vector<1x16x16xf32> to vector<16x16xf32>
    %cst = arith.constant dense<0.000000e+00> : vector<16x32xf32>
    %4 = tpu.matmul %3, %1, %cst {dimension_numbers = #tpu.dot_dimension_numbers<[1], [0], [0], [1], [0, 0, 1, 1], [], []>} : vector<16x16xf32>, vector<16x32xf32>, vector<16x32xf32> -> vector<16x32xf32>
    %c0_4 = arith.constant 0 : index
    %c0_5 = arith.constant 0 : index
    %c0_6 = arith.constant 0 : index
    %5 = vector.load %arg3[%c0_4, %c0_5, %c0_6] : memref<1x16x32xf32, #tpu.memory_space<vmem>>, vector<1x16x32xf32>
    %6 = vector.shape_cast %5 : vector<1x16x32xf32> to vector<16x32xf32>
    %7 = vector.shape_cast %4 : vector<16x32xf32> to vector<1x16x32xf32>
    tpu.vector_store %arg3[%c0_4, %c0_5, %c0_6], %7 {strides = array<i32>} : memref<1x16x32xf32, #tpu.memory_space<vmem>>, vector<1x16x32xf32>,
    return
  }
  func.func @transform_0(%arg0: i32) -> (i32, i32, i32) {
    %c0_i32 = arith.constant 0 : i32
    %c0_i32_0 = arith.constant 0 : i32
    %c0_i32_1 = arith.constant 0 : i32
    return %arg0, %c0_i32, %c0_i32_0 : i32, i32, i32
  }
  func.func @transform_1(%arg0: i32) -> (i32, i32, i32) {
    %c0_i32 = arith.constant 0 : i32
    %c0_i32_0 = arith.constant 0 : i32
    %c0_i32_1 = arith.constant 0 : i32
    return %arg0, %c0_i32, %c0_i32_0 : i32, i32, i32
  }
  func.func @transform_2(%arg0: i32) -> (i32, i32, i32) {
    %c0_i32 = arith.constant 0 : i32
    %c0_i32_0 = arith.constant 0 : i32
    %c0_i32_1 = arith.constant 0 : i32
    return %arg0, %c0_i32, %c0_i32_0 : i32, i32, i32
  }
}

module attributes {stable_mosaic.version = 11 : i64} {
  func.func @_proj_residual_kernel(%arg0: i32, %arg1: memref<32x32xf32, #tpu.memory_space<vmem>>, %arg2: memref<32x32xf32, #tpu.memory_space<vmem>>, %arg3: memref<32x32xbf16, #tpu.memory_space<vmem>>, %arg4: memref<1x32xf32, #tpu.memory_space<vmem>>, %arg5: memref<32x32xf32, #tpu.memory_space<vmem>>) attributes {dimension_semantics = [#tpu.dimension_semantics<parallel>], iteration_bounds = array<i64: 1>, scalar_prefetch = 0 : i64, scratch_operands = 0 : i64, tpu.core_type = #tpu.core_type<tc>, window_params = [{transform_indices = @transform_0, window_bounds = array<i64: 32, 32>}, {transform_indices = @transform_1, window_bounds = array<i64: 32, 32>}, {pipeline_mode = #tpu.pipeline_mode<synchronous>, transform_indices = @transform_2, window_bounds = array<i64: 32, 32>}, {pipeline_mode = #tpu.pipeline_mode<synchronous>, transform_indices = @transform_3, window_bounds = array<i64: 1, 32>}, {transform_indices = @transform_4, window_bounds = array<i64: 32, 32>}]} {
    %c0 = arith.constant 0 : index
    %c0_0 = arith.constant 0 : index
    %0 = vector.load %arg2[%c0, %c0_0] : memref<32x32xf32, #tpu.memory_space<vmem>>, vector<32x32xf32>
    %c0_1 = arith.constant 0 : index
    %c0_2 = arith.constant 0 : index
    %1 = vector.load %arg1[%c0_1, %c0_2] : memref<32x32xf32, #tpu.memory_space<vmem>>, vector<32x32xf32>
    %2 = arith.truncf %1 : vector<32x32xf32> to vector<32x32xbf16>
    %c0_3 = arith.constant 0 : index
    %c0_4 = arith.constant 0 : index
    %3 = vector.load %arg3[%c0_3, %c0_4] : memref<32x32xbf16, #tpu.memory_space<vmem>>, vector<32x32xbf16>
    %cst = arith.constant dense<0.000000e+00> : vector<32x32xf32>
    %4 = tpu.matmul %2, %3, %cst {dimension_numbers = #tpu.dot_dimension_numbers<[1], [0], [0], [1], [0, 0, 1, 1], [], []>} : vector<32x32xbf16>, vector<32x32xbf16>, vector<32x32xf32> -> vector<32x32xf32>
    %5 = arith.addf %0, %4 : vector<32x32xf32>
    %c0_5 = arith.constant 0 : index
    %c0_6 = arith.constant 0 : index
    %6 = vector.load %arg4[%c0_5, %c0_6] : memref<1x32xf32, #tpu.memory_space<vmem>>, vector<1x32xf32>
    %7 = vector.broadcast %6 : vector<1x32xf32> to vector<32x32xf32>
    %8 = arith.addf %5, %7 : vector<32x32xf32>
    %c0_7 = arith.constant 0 : index
    %c0_8 = arith.constant 0 : index
    %9 = vector.load %arg5[%c0_7, %c0_8] : memref<32x32xf32, #tpu.memory_space<vmem>>, vector<32x32xf32>
    tpu.vector_store %arg5[%c0_7, %c0_8], %8 {strides = array<i32>} : memref<32x32xf32, #tpu.memory_space<vmem>>, vector<32x32xf32>,
    return
  }
  func.func @transform_0(%arg0: i32) -> (i32, i32) {
    %c0_i32 = arith.constant 0 : i32
    %c0_i32_0 = arith.constant 0 : i32
    return %arg0, %c0_i32 : i32, i32
  }
  func.func @transform_1(%arg0: i32) -> (i32, i32) {
    %c0_i32 = arith.constant 0 : i32
    %c0_i32_0 = arith.constant 0 : i32
    return %arg0, %c0_i32 : i32, i32
  }
  func.func @transform_2(%arg0: i32) -> (i32, i32) {
    %c0_i32 = arith.constant 0 : i32
    %c0_i32_0 = arith.constant 0 : i32
    %c0_i32_1 = arith.constant 0 : i32
    return %c0_i32, %c0_i32_0 : i32, i32
  }
  func.func @transform_3(%arg0: i32) -> (i32, i32) {
    %c0_i32 = arith.constant 0 : i32
    %c0_i32_0 = arith.constant 0 : i32
    %c0_i32_1 = arith.constant 0 : i32
    return %c0_i32, %c0_i32_0 : i32, i32
  }
  func.func @transform_4(%arg0: i32) -> (i32, i32) {
    %c0_i32 = arith.constant 0 : i32
    %c0_i32_0 = arith.constant 0 : i32
    return %arg0, %c0_i32 : i32, i32
  }
}

module attributes {stable_mosaic.version = 11 : i64} {
  func.func @_ln_mlp_residual_kernel(%arg0: i32, %arg1: memref<32x32xf32, #tpu.memory_space<vmem>>, %arg2: memref<1x32xf32, #tpu.memory_space<vmem>>, %arg3: memref<1x32xf32, #tpu.memory_space<vmem>>, %arg4: memref<32x128xbf16, #tpu.memory_space<vmem>>, %arg5: memref<1x128xf32, #tpu.memory_space<vmem>>, %arg6: memref<128x32xbf16, #tpu.memory_space<vmem>>, %arg7: memref<1x32xf32, #tpu.memory_space<vmem>>, %arg8: memref<32x32xf32, #tpu.memory_space<vmem>>) attributes {dimension_semantics = [#tpu.dimension_semantics<parallel>], iteration_bounds = array<i64: 1>, scalar_prefetch = 0 : i64, scratch_operands = 0 : i64, tpu.core_type = #tpu.core_type<tc>, window_params = [{transform_indices = @transform_0, window_bounds = array<i64: 32, 32>}, {pipeline_mode = #tpu.pipeline_mode<synchronous>, transform_indices = @transform_1, window_bounds = array<i64: 1, 32>}, {pipeline_mode = #tpu.pipeline_mode<synchronous>, transform_indices = @transform_2, window_bounds = array<i64: 1, 32>}, {pipeline_mode = #tpu.pipeline_mode<synchronous>, transform_indices = @transform_3, window_bounds = array<i64: 32, 128>}, {pipeline_mode = #tpu.pipeline_mode<synchronous>, transform_indices = @transform_4, window_bounds = array<i64: 1, 128>}, {pipeline_mode = #tpu.pipeline_mode<synchronous>, transform_indices = @transform_5, window_bounds = array<i64: 128, 32>}, {pipeline_mode = #tpu.pipeline_mode<synchronous>, transform_indices = @transform_6, window_bounds = array<i64: 1, 32>}, {transform_indices = @transform_7, window_bounds = array<i64: 32, 32>}]} {
    %c0 = arith.constant 0 : index
    %c0_0 = arith.constant 0 : index
    %0 = vector.load %arg1[%c0, %c0_0] : memref<32x32xf32, #tpu.memory_space<vmem>>, vector<32x32xf32>
    %c0_1 = arith.constant 0 : index
    %c0_2 = arith.constant 0 : index
    %1 = vector.load %arg2[%c0_1, %c0_2] : memref<1x32xf32, #tpu.memory_space<vmem>>, vector<1x32xf32>
    %c0_3 = arith.constant 0 : index
    %c0_4 = arith.constant 0 : index
    %2 = vector.load %arg3[%c0_3, %c0_4] : memref<1x32xf32, #tpu.memory_space<vmem>>, vector<1x32xf32>
    %cst = arith.constant dense<0.000000e+00> : vector<32xf32>
    %3 = vector.multi_reduction <add>, %0, %cst [1] : vector<32x32xf32> to vector<32xf32>
    %4 = vector.shape_cast %3 : vector<32xf32> to vector<32x1xf32>
    %cst_5 = arith.constant 3.200000e+01 : f32
    %5 = vector.broadcast %cst_5 : f32 to vector<32x1xf32>
    %6 = arith.divf %4, %5 : vector<32x1xf32>
    %7 = vector.broadcast %6 : vector<32x1xf32> to vector<32x32xf32>
    %8 = arith.subf %0, %7 : vector<32x32xf32>
    %9 = arith.mulf %8, %8 : vector<32x32xf32>
    %cst_6 = arith.constant dense<0.000000e+00> : vector<32xf32>
    %10 = vector.multi_reduction <add>, %9, %cst_6 [1] : vector<32x32xf32> to vector<32xf32>
    %11 = vector.shape_cast %10 : vector<32xf32> to vector<32x1xf32>
    %cst_7 = arith.constant 3.200000e+01 : f32
    %12 = vector.broadcast %cst_7 : f32 to vector<32x1xf32>
    %13 = arith.divf %11, %12 : vector<32x1xf32>
    %14 = vector.broadcast %6 : vector<32x1xf32> to vector<32x32xf32>
    %15 = arith.subf %0, %14 : vector<32x32xf32>
    %cst_8 = arith.constant 9.99999974E-6 : f32
    %16 = vector.broadcast %cst_8 : f32 to vector<32x1xf32>
    %17 = arith.addf %13, %16 : vector<32x1xf32>
    %18 = math.rsqrt %17 : vector<32x1xf32>
    %19 = vector.broadcast %18 : vector<32x1xf32> to vector<32x32xf32>
    %20 = arith.mulf %15, %19 : vector<32x32xf32>
    %21 = vector.broadcast %1 : vector<1x32xf32> to vector<32x32xf32>
    %22 = arith.mulf %20, %21 : vector<32x32xf32>
    %23 = vector.broadcast %2 : vector<1x32xf32> to vector<32x32xf32>
    %24 = arith.addf %22, %23 : vector<32x32xf32>
    %25 = arith.truncf %24 : vector<32x32xf32> to vector<32x32xbf16>
    %c0_9 = arith.constant 0 : index
    %c0_10 = arith.constant 0 : index
    %26 = vector.load %arg4[%c0_9, %c0_10] : memref<32x128xbf16, #tpu.memory_space<vmem>>, vector<32x128xbf16>
    %cst_11 = arith.constant dense<0.000000e+00> : vector<32x128xf32>
    %27 = tpu.matmul %25, %26, %cst_11 {dimension_numbers = #tpu.dot_dimension_numbers<[1], [0], [0], [1], [0, 0, 1, 1], [], []>} : vector<32x32xbf16>, vector<32x128xbf16>, vector<32x128xf32> -> vector<32x128xf32>
    %c0_12 = arith.constant 0 : index
    %c0_13 = arith.constant 0 : index
    %28 = vector.load %arg5[%c0_12, %c0_13] : memref<1x128xf32, #tpu.memory_space<vmem>>, vector<1x128xf32>
    %29 = vector.broadcast %28 : vector<1x128xf32> to vector<32x128xf32>
    %30 = arith.addf %27, %29 : vector<32x128xf32>
    %cst_14 = arith.constant 5.000000e-01 : f32
    %31 = vector.broadcast %cst_14 : f32 to vector<32x128xf32>
    %32 = arith.mulf %31, %30 : vector<32x128xf32>
    %cst_15 = arith.constant 0.707106769 : f32
    %33 = vector.broadcast %cst_15 : f32 to vector<32x128xf32>
    %34 = arith.mulf %30, %33 : vector<32x128xf32>
    %cst_16 = arith.constant 0.000000e+00 : f32
    %35 = vector.broadcast %cst_16 : f32 to vector<32x128xf32>
    %36 = arith.cmpf oge, %34, %35 : vector<32x128xf32>
    %cst_17 = arith.constant 1.000000e+00 : f32
    %cst_18 = arith.constant -1.000000e+00 : f32
    %37 = vector.broadcast %cst_17 : f32 to vector<32x128xf32>
    %38 = vector.broadcast %cst_18 : f32 to vector<32x128xf32>
    %39 = arith.select %36, %37, %38 : vector<32x128xi1>, vector<32x128xf32>
    %40 = math.absf %34 : vector<32x128xf32>
    %cst_19 = arith.constant 0.327591091 : f32
    %41 = vector.broadcast %cst_19 : f32 to vector<32x128xf32>
    %42 = arith.mulf %41, %40 : vector<32x128xf32>
    %cst_20 = arith.constant 1.000000e+00 : f32
    %43 = vector.broadcast %cst_20 : f32 to vector<32x128xf32>
    %44 = arith.addf %43, %42 : vector<32x128xf32>
    %cst_21 = arith.constant 1.000000e+00 : f32
    %45 = vector.broadcast %cst_21 : f32 to vector<32x128xf32>
    %46 = arith.divf %45, %44 : vector<32x128xf32>
    %cst_22 = arith.constant 1.06140542 : f32
    %47 = vector.broadcast %cst_22 : f32 to vector<32x128xf32>
    %48 = arith.mulf %47, %46 : vector<32x128xf32>
    %cst_23 = arith.constant -1.45315206 : f32
    %49 = vector.broadcast %cst_23 : f32 to vector<32x128xf32>
    %50 = arith.addf %48, %49 : vector<32x128xf32>
    %51 = arith.mulf %50, %46 : vector<32x128xf32>
    %cst_24 = arith.constant 1.42141378 : f32
    %52 = vector.broadcast %cst_24 : f32 to vector<32x128xf32>
    %53 = arith.addf %51, %52 : vector<32x128xf32>
    %54 = arith.mulf %53, %46 : vector<32x128xf32>
    %cst_25 = arith.constant -0.284496725 : f32
    %55 = vector.broadcast %cst_25 : f32 to vector<32x128xf32>
    %56 = arith.addf %54, %55 : vector<32x128xf32>
    %57 = arith.mulf %56, %46 : vector<32x128xf32>
    %cst_26 = arith.constant 0.254829586 : f32
    %58 = vector.broadcast %cst_26 : f32 to vector<32x128xf32>
    %59 = arith.addf %57, %58 : vector<32x128xf32>
    %60 = arith.mulf %59, %46 : vector<32x128xf32>
    %cst_27 = arith.constant 0.000000e+00 : f32
    %61 = vector.broadcast %cst_27 : f32 to vector<32x128xf32>
    %62 = arith.subf %61, %40 : vector<32x128xf32>
    %63 = arith.mulf %62, %40 : vector<32x128xf32>
    %64 = math.exp %63 : vector<32x128xf32>
    %65 = arith.mulf %60, %64 : vector<32x128xf32>
    %cst_28 = arith.constant 1.000000e+00 : f32
    %66 = vector.broadcast %cst_28 : f32 to vector<32x128xf32>
    %67 = arith.subf %66, %65 : vector<32x128xf32>
    %68 = arith.mulf %39, %67 : vector<32x128xf32>
    %cst_29 = arith.constant 1.000000e+00 : f32
    %69 = vector.broadcast %cst_29 : f32 to vector<32x128xf32>
    %70 = arith.addf %69, %68 : vector<32x128xf32>
    %71 = arith.mulf %32, %70 : vector<32x128xf32>
    %72 = arith.truncf %71 : vector<32x128xf32> to vector<32x128xbf16>
    %c0_30 = arith.constant 0 : index
    %c0_31 = arith.constant 0 : index
    %73 = vector.load %arg6[%c0_30, %c0_31] : memref<128x32xbf16, #tpu.memory_space<vmem>>, vector<128x32xbf16>
    %cst_32 = arith.constant dense<0.000000e+00> : vector<32x32xf32>
    %74 = tpu.matmul %72, %73, %cst_32 {dimension_numbers = #tpu.dot_dimension_numbers<[1], [0], [0], [1], [0, 0, 1, 1], [], []>} : vector<32x128xbf16>, vector<128x32xbf16>, vector<32x32xf32> -> vector<32x32xf32>
    %c0_33 = arith.constant 0 : index
    %c0_34 = arith.constant 0 : index
    %75 = vector.load %arg7[%c0_33, %c0_34] : memref<1x32xf32, #tpu.memory_space<vmem>>, vector<1x32xf32>
    %76 = vector.broadcast %75 : vector<1x32xf32> to vector<32x32xf32>
    %77 = arith.addf %74, %76 : vector<32x32xf32>
    %78 = arith.addf %0, %77 : vector<32x32xf32>
    %c0_35 = arith.constant 0 : index
    %c0_36 = arith.constant 0 : index
    %79 = vector.load %arg8[%c0_35, %c0_36] : memref<32x32xf32, #tpu.memory_space<vmem>>, vector<32x32xf32>
    tpu.vector_store %arg8[%c0_35, %c0_36], %78 {strides = array<i32>} : memref<32x32xf32, #tpu.memory_space<vmem>>, vector<32x32xf32>,
    return
  }
  func.func @transform_0(%arg0: i32) -> (i32, i32) {
    %c0_i32 = arith.constant 0 : i32
    %c0_i32_0 = arith.constant 0 : i32
    return %arg0, %c0_i32 : i32, i32
  }
  func.func @transform_1(%arg0: i32) -> (i32, i32) {
    %c0_i32 = arith.constant 0 : i32
    %c0_i32_0 = arith.constant 0 : i32
    %c0_i32_1 = arith.constant 0 : i32
    return %c0_i32, %c0_i32_0 : i32, i32
  }
  func.func @transform_2(%arg0: i32) -> (i32, i32) {
    %c0_i32 = arith.constant 0 : i32
    %c0_i32_0 = arith.constant 0 : i32
    %c0_i32_1 = arith.constant 0 : i32
    return %c0_i32, %c0_i32_0 : i32, i32
  }
  func.func @transform_3(%arg0: i32) -> (i32, i32) {
    %c0_i32 = arith.constant 0 : i32
    %c0_i32_0 = arith.constant 0 : i32
    %c0_i32_1 = arith.constant 0 : i32
    return %c0_i32, %c0_i32_0 : i32, i32
  }
  func.func @transform_4(%arg0: i32) -> (i32, i32) {
    %c0_i32 = arith.constant 0 : i32
    %c0_i32_0 = arith.constant 0 : i32
    %c0_i32_1 = arith.constant 0 : i32
    return %c0_i32, %c0_i32_0 : i32, i32
  }
  func.func @transform_5(%arg0: i32) -> (i32, i32) {
    %c0_i32 = arith.constant 0 : i32
    %c0_i32_0 = arith.constant 0 : i32
    %c0_i32_1 = arith.constant 0 : i32
    return %c0_i32, %c0_i32_0 : i32, i32
  }
  func.func @transform_6(%arg0: i32) -> (i32, i32) {
    %c0_i32 = arith.constant 0 : i32
    %c0_i32_0 = arith.constant 0 : i32
    %c0_i32_1 = arith.constant 0 : i32
    return %c0_i32, %c0_i32_0 : i32, i32
  }
  func.func @transform_7(%arg0: i32) -> (i32, i32) {
    %c0_i32 = arith.constant 0 : i32
    %c0_i32_0 = arith.constant 0 : i32
    return %arg0, %c0_i32 : i32, i32
  }
}

</mosaic_0001>

<llo_original>
// kernel: block_forward.5
$region0: #{block_forward.5}
  #allocation0 [shape = 'u32[]', space=smem, size = 0x4, offset = 0x4, fixed_abs, tag = 'smem constant byte address 0x4 - core index']
  #allocation1 [shape = 'u32[72,128]{1,0:T(1,128)}', space=vmem, size = 0x9000, scoped, tag = 'internal scratch']
  %s0 = inlined_call_operand.hbm [shape: f32[32,32], index: 0, kind: input, shape index: {}]
  %s1 = inlined_call_operand.vmem [shape: f32[1,32], index: 1, kind: input, shape index: {}]
  %s2 = inlined_call_operand.vmem [shape: f32[1,32], index: 2, kind: input, shape index: {}]
  %s3 = inlined_call_operand.hbm [shape: bf16[32,96], index: 3, kind: input, shape index: {}]
  %s4 = inlined_call_operand.vmem [shape: f32[1,96], index: 4, kind: input, shape index: {}]
  %s5 = inlined_call_operand.vmem [shape: f32[32,96], index: 5, kind: output, shape index: {}]
  %s6 = sld [smem:[#allocation0]]
  $region38: #{block_forward.5} parent=0
    _
  %s8 = ssub.s32 1, %s6
  %s9 = scalar_select 0, %s8, %s6
  $region1: #{block_forward.5} parent=0
    #allocation2 [shape = 'u8[16384]{0}', space=vmem, size = 0x4000, scoped, tag = 'input window, operand 0, single buffered']
    #allocation3 [shape = 's32[1]{0}', space=sflag, size = 0x4, scoped, tag = 'scoped memory for block_forward.5']
    #allocation4 [shape = 'u8[8192]{0}', space=vmem, size = 0x2000, scoped, tag = 'input window, operand 3, single buffered']
    #allocation5 [shape = 's32[1]{0}', space=sflag, size = 0x4, scoped, tag = 'scoped memory for block_forward.5']
    %10 = vsyncpa [#allocation3], 0
    %11 = vsyncpa [#allocation5], 0
    // Predicated region
    $region2: #{block_forward.5} parent=1 // pred_check
      _
    $region3: #{block_forward.5} parent=1 // pred_check_branch
      %13 = sbr.rel (0) target = $region5
    $region4: #{block_forward.5} parent=1 // pred_region
      %15 = vsyncadd [#allocation3], 0
      %s16 = sshll.u32 %s0, 4
      %s17 = int_to_ptr.hbm [resolvable:$true] %s16
      %s18 = sshll.u32 [#allocation2], 4
      %s19 = int_to_ptr.vmem [resolvable:$true] %s18
      %24 = dma.hbm_to_vmem [thread:$0]  %s17, 512, %s19, [#allocation3], 128, 128, 8
    $region5: #{block_forward.5} parent=1 // pred_fallthru
      _
    // Predicated region
    $region6: #{block_forward.5} parent=1 // pred_check
      _
    $region7: #{block_forward.5} parent=1 // pred_check_branch
      %26 = sbr.rel (0) target = $region9
    $region8: #{block_forward.5} parent=1 // pred_region
      _
    $region9: #{block_forward.5} parent=1 // pred_fallthru
      _
    // Predicated region
    $region10: #{block_forward.5} parent=1 // pred_check
      _
    $region11: #{block_forward.5} parent=1 // pred_check_branch
      %28 = sbr.rel (0) target = $region13
    $region12: #{block_forward.5} parent=1 // pred_region
      _
    $region13: #{block_forward.5} parent=1 // pred_fallthru
      _
    // Predicated region
    $region14: #{block_forward.5} parent=1 // pred_check
      _
    $region15: #{block_forward.5} parent=1 // pred_check_branch
      %30 = sbr.rel (0) target = $region17
    $region16: #{block_forward.5} parent=1 // pred_region
      %32 = vsyncadd [#allocation5], 0
      %s33 = sshll.u32 %s3, 4
      %s34 = int_to_ptr.hbm [resolvable:$true] %s33
      %s35 = sshll.u32 [#allocation4], 4
      %s36 = int_to_ptr.vmem [resolvable:$true] %s35
      %41 = dma.hbm_to_vmem [thread:$0]  %s34, 256, %s36, [#allocation5], 64, 64, 4
    $region17: #{block_forward.5} parent=1 // pred_fallthru
      _
    // Predicated region
    $region18: #{block_forward.5} parent=1 // pred_check
      _
    $region19: #{block_forward.5} parent=1 // pred_check_branch
      %43 = sbr.rel (0) target = $region21
    $region20: #{block_forward.5} parent=1 // pred_region
      _
    $region21: #{block_forward.5} parent=1 // pred_fallthru
      _
    // Predicated region
    $region22: #{block_forward.5} parent=1 // pred_check
      _
    $region23: #{block_forward.5} parent=1 // pred_check_branch
      %45 = sbr.rel (0) target = $region25
    $region24: #{block_forward.5} parent=1 // pred_region
      %47 = dma.done [#allocation3], 512
    $region25: #{block_forward.5} parent=1 // pred_fallthru
      _
    // Predicated region
    $region26: #{block_forward.5} parent=1 // pred_check
      _
    $region27: #{block_forward.5} parent=1 // pred_check_branch
      %49 = sbr.rel (0) target = $region29
    $region28: #{block_forward.5} parent=1 // pred_region
      %51 = dma.done [#allocation5], 256
    $region29: #{block_forward.5} parent=1 // pred_fallthru
      _
    %v53 = vld [vmem:[#allocation2] sm:$0xff]
    %v54 = vld [vmem:[#allocation2 + $0x8] sm:$0xff]
    %v55 = vld [vmem:[#allocation2 + $0x10] sm:$0xff]
    %v56 = vld [vmem:[#allocation2 + $0x18] sm:$0xff]
    %v57 = vld [vmem:[%s1] sm:$0x1]
    %v58 = vld [vmem:[%s2] sm:$0x1]
    %vm59 = vcmask 261120
    %v60 = vsel %vm59, %v53, 0.0
    %61 = vadd.xlane.f32.xlu0 %v60
    %v62 = vpop.xlane.xlu0 %61
    %v63 = vsel %vm59, %v54, 0.0
    %64 = vadd.xlane.f32.xlu0 %v63
    %v65 = vpop.xlane.xlu0 %64
    %v66 = vsel %vm59, %v55, 0.0
    %67 = vadd.xlane.f32.xlu0 %v66
    %v68 = vpop.xlane.xlu0 %67
    %v69 = vsel %vm59, %v56, 0.0
    %70 = vadd.xlane.f32.xlu0 %v69
    %v71 = vpop.xlane.xlu0 %70
    %v72 = vrcp.pop 32.0
    %v73 = vmul.f32 32.0, %v72
    %v74 = vsub.f32 1.0, %v73
    %v75 = vmul.f32 %v72, %v74
    %v76 = vadd.f32 %v72, %v75
    %vm77 = vweird.f32 %v72
    %v78 = vsel %vm77, %v72, %v76
    %v79 = vmul.f32 %v62, %v78
    %v80 = vmul.f32 %v65, %v78
    %v81 = vmul.f32 %v68, %v78
    %v82 = vmul.f32 %v71, %v78
    %v83 = vsub.f32 %v53, %v79
    %v84 = vsub.f32 %v54, %v80
    %v85 = vsub.f32 %v55, %v81
    %v86 = vsub.f32 %v56, %v82
    %v87 = vmul.f32 %v83, %v83
    %v88 = vmul.f32 %v84, %v84
    %v89 = vmul.f32 %v85, %v85
    %v90 = vmul.f32 %v86, %v86
    %v91 = vsel %vm59, %v87, 0.0
    %92 = vadd.xlane.f32.xlu0 %v91
    %v93 = vpop.xlane.xlu0 %92
    %v94 = vsel %vm59, %v88, 0.0
    %95 = vadd.xlane.f32.xlu0 %v94
    %v96 = vpop.xlane.xlu0 %95
    %v97 = vsel %vm59, %v89, 0.0
    %98 = vadd.xlane.f32.xlu0 %v97
    %v99 = vpop.xlane.xlu0 %98
    %v100 = vsel %vm59, %v90, 0.0
    %101 = vadd.xlane.f32.xlu0 %v100
    %v102 = vpop.xlane.xlu0 %101
    %v103 = vmul.f32 %v93, %v78
    %v104 = vmul.f32 %v96, %v78
    %v105 = vmul.f32 %v99, %v78
    %v106 = vmul.f32 %v102, %v78
    %v107 = vadd.f32 %v103, 1e-05
    %v108 = vadd.f32 %v104, 1e-05
    %v109 = vadd.f32 %v105, 1e-05
    %v110 = vadd.f32 %v106, 1e-05
    %v111 = vrsqrt.pop %v107
    %v112 = vmul.f32 %v111, %v107
    %v113 = vmul.f32 %v112, %v111
    %v114 = vmul.f32 0.5, %v113
    %v115 = vsub.f32 1.5, %v114
    %v116 = vmul.f32 %v111, %v115
    %vm117 = vweird.f32 %v107
    %vm118 = vweird.f32 %v111
    %vm119 = vmor %vm117, %vm118
    %v120 = vsel %vm119, %v111, %v116
    %v121 = vrsqrt.pop %v108
    %v122 = vmul.f32 %v121, %v108
    %v123 = vmul.f32 %v122, %v121
    %v124 = vmul.f32 0.5, %v123
    %v125 = vsub.f32 1.5, %v124
    %v126 = vmul.f32 %v121, %v125
    %vm127 = vweird.f32 %v108
    %vm128 = vweird.f32 %v121
    %vm129 = vmor %vm127, %vm128
    %v130 = vsel %vm129, %v121, %v126
    %v131 = vrsqrt.pop %v109
    %v132 = vmul.f32 %v131, %v109
    %v133 = vmul.f32 %v132, %v131
    %v134 = vmul.f32 0.5, %v133
    %v135 = vsub.f32 1.5, %v134
    %v136 = vmul.f32 %v131, %v135
    %vm137 = vweird.f32 %v109
    %vm138 = vweird.f32 %v131
    %vm139 = vmor %vm137, %vm138
    %v140 = vsel %vm139, %v131, %v136
    %v141 = vrsqrt.pop %v110
    %v142 = vmul.f32 %v141, %v110
    %v143 = vmul.f32 %v142, %v141
    %v144 = vmul.f32 0.5, %v143
    %v145 = vsub.f32 1.5, %v144
    %v146 = vmul.f32 %v141, %v145
    %vm147 = vweird.f32 %v110
    %vm148 = vweird.f32 %v141
    %vm149 = vmor %vm147, %vm148
    %v150 = vsel %vm149, %v141, %v146
    %v151 = vmul.f32 %v83, %v120
    %v152 = vmul.f32 %v84, %v130
    %v153 = vmul.f32 %v85, %v140
    %v154 = vmul.f32 %v86, %v150
    %v156 = vperm.slane %v57, 0
    %v158 = vmul.f32 %v151, %v156
    %v159 = vmul.f32 %v152, %v156
    %v160 = vmul.f32 %v153, %v156
    %v161 = vmul.f32 %v154, %v156
    %v163 = vperm.slane %v58, 0
    %v165 = vadd.f32 %v158, %v163
    %v166 = vadd.f32 %v159, %v163
    %v167 = vadd.f32 %v160, %v163
    %v168 = vadd.f32 %v161, %v163
    %v169 = vpack.c.bf16 %v166, %v165
    %v170 = vpack.c.bf16 %v168, %v167
    %v171 = vld [vmem:[#allocation4] sm:$0xf]
    %v172 = vld [vmem:[#allocation4 + $0x4] sm:$0xf]
    %v173 = vld [vmem:[#allocation4 + $0x8] sm:$0xf]
    %v174 = vld [vmem:[#allocation4 + $0xc] sm:$0xf]
    %v175 = vld [vmem:[%s4] sm:$0x1]
    %v177 = vperm.slane %v175, 0
    %v183 = vunpack.c.l.b16 %v171
    %v184 = vunpack.c.l.b16 %v172
    %v185 = vunpack.c.l.b16 %v173
    %v186 = vunpack.c.l.b16 %v174
    %v187 = vpack.c.b16 %v184, %v183
    %v188 = vpack.c.b16 %v186, %v185
    %v192 = vsel %vm59, %v169, 0
    %v195 = vsel %vm59, %v170, 0
    %197 = vmatpush.bf16.msra.mxu0 0
    %198 = vmatpush.bf16.msra.mxu0 0
    %199 = vmatpush.bf16.msra.mxu0 0
    %200 = vmatpush.bf16.msra.mxu0 0
    %201 = vmatpush.bf16.msra.mxu0 0
    %202 = vmatpush.bf16.msra.mxu0 0
    %203 = vmatpush.bf16.msra.mxu0 %v188
    %204 = vmatpush.bf16.msra.mxu0 %v187
    %205 = vmatmul.bf16.gmra.mxu0 %v192
    %v206 = vpop.f32.mrf.mxu0
    %v207 = vadd.f32 %v177, %v206
    %v208 = vpop.f32.mrf.mxu0
    %v209 = vadd.f32 %v177, %v208
    %210 = vmatmul.bf16.gmra.mxu0 %v195
    %v211 = vpop.f32.mrf.mxu0
    %v212 = vadd.f32 %v177, %v211
    %v213 = vpop.f32.mrf.mxu0
    %v214 = vadd.f32 %v177, %v213
    %215 = vdwg.mxu0
    %vm216 = vcmask 785408
    %217 = vst.msk [vmem:[%s5] sm:$0xff] %vm216, %v207
    %218 = vst.msk [vmem:[%s5 + $0x8] sm:$0xff] %vm216, %v209
    %219 = vst.msk [vmem:[%s5 + $0x10] sm:$0xff] %vm216, %v212
    %220 = vst.msk [vmem:[%s5 + $0x18] sm:$0xff] %vm216, %v214
    // Predicated region
    $region30: #{block_forward.5} parent=1 // pred_check
      _
    $region31: #{block_forward.5} parent=1 // pred_check_branch
      %222 = sbr.rel (0) target = $region33
    $region32: #{block_forward.5} parent=1 // pred_region
      _
    $region33: #{block_forward.5} parent=1 // pred_fallthru
      _
    // Predicated region
    $region34: #{block_forward.5} parent=1 // pred_check
      _
    $region35: #{block_forward.5} parent=1 // pred_check_branch
      %224 = sbr.rel (0) target = $region37
    $region36: #{block_forward.5} parent=1 // pred_region
      _
    $region37: #{block_forward.5} parent=1 // pred_fallthru
      _
    %225 = vsyncpa [#allocation3], 1
    %226 = vsyncpa [#allocation5], 1

// kernel: block_forward.6
$region0: #{block_forward.6}
  #allocation0 [shape = 'u32[]', space=smem, size = 0x4, offset = 0x4, fixed_abs, tag = 'smem constant byte address 0x4 - core index']
  #allocation1 [shape = 'u32[72,128]{1,0:T(1,128)}', space=vmem, size = 0x9000, scoped, tag = 'internal scratch']
  %s0 = inlined_call_operand.vmem [shape: f32[2,16,96], index: 0, kind: input, shape index: {}]
  %s1 = inlined_call_operand.vmem [shape: f32[16,16], index: 1, kind: input, shape index: {}]
  %s2 = inlined_call_operand.vmem [shape: f32[16,16], index: 2, kind: input, shape index: {}]
  %s3 = inlined_call_operand.vmem [shape: f32[2,16,1], index: 3, kind: output, shape index: {}]
  %s4 = sld [smem:[#allocation0]]
  $region45: #{block_forward.6} parent=0
    _
  %s6 = ssub.s32 1, %s4
  %s7 = scalar_select 0, %s6, %s4
  loop: start=0, step=1, limit=4
  $region2: #{block_forward.6} parent=0 // loop_pre_header
    _
  $region3: #{block_forward.6} parent=0 // loop_header
    %s9 = sphi 0, %s13
    %p10 = scmp.ge.s32.totalorder %s9, 4
    %s19 = sphi 0, %s21
    %s22 = sphi 0, %s19
    %s23 = sphi 0, %s22
    %s39 = sphi 0, %s23
    %s43 = sphi 0, %s43
    %s45 = sphi 0, %s43
    %s46 = sphi 0, %s45
    %s60 = sphi 0, %s46
    %s64 = sphi 0, %s64
    %s66 = sphi 0, %s64
    %s67 = sphi 0, %s66
    %s81 = sphi 0, %s67
    %s87 = sphi 0, %s89
    %s90 = sphi 0, %s87
    %s91 = sphi 0, %s90
    %s107 = sphi 0, %s91
  $region4: #{block_forward.6} parent=0 // loop_header_branch
    %12 = sbr.rel (%p10) target = $region8
  $region5: #{block_forward.6} parent=0 // loop_body
    %s14 = ssub.s32 %s9, 1
    %s15 = ssub.s32 %s9, 2
    %s16 = sadd.s32 %s9, 1
    %s17 = ssub.s32 %s9, %s16
    %p18 = scmp.eq.s32.totalorder %s17, 0
    %s20 = sadd.s32 %s19, 1
    %s21 = scalar_select %p18, %s19, %s20
    %p24 = pneg %p18
    %p25 = scmp.eq.s32.totalorder %s9, 1
    %p26 = por %p24, %p25
    %p27 = scmp.ne.s32.totalorder %s19, %s22
    %p28 = scmp.eq.s32.totalorder %s9, 0
    %p29 = por %p27, %p28
    %p30 = scmp.ne.s32.totalorder %s19, %s22
    %p31 = scmp.eq.s32.totalorder %s14, 1
    %p32 = por %p30, %p31
    %p33 = scmp.ne.s32.totalorder %s22, %s23
    %p34 = scmp.eq.s32.totalorder %s14, 0
    %p35 = por %p33, %p34
    %p36 = scmp.ne.s32.totalorder %s22, %s23
    %p37 = scmp.eq.s32.totalorder %s15, 1
    %p38 = por %p36, %p37
    %p40 = scmp.ne.s32.totalorder %s23, %s39
    %p41 = scmp.eq.s32.totalorder %s15, 0
    %p42 = por %p40, %p41
    %s44 = sadd.s32 %s43, 1
    %p47 = scmp.eq.s32.totalorder %s9, 1
    %p48 = scmp.ne.s32.totalorder %s43, %s45
    %p49 = scmp.eq.s32.totalorder %s9, 0
    %p50 = por %p48, %p49
    %p51 = scmp.ne.s32.totalorder %s43, %s45
    %p52 = scmp.eq.s32.totalorder %s14, 1
    %p53 = por %p51, %p52
    %p54 = scmp.ne.s32.totalorder %s45, %s46
    %p55 = scmp.eq.s32.totalorder %s14, 0
    %p56 = por %p54, %p55
    %p57 = scmp.ne.s32.totalorder %s45, %s46
    %p58 = scmp.eq.s32.totalorder %s15, 1
    %p59 = por %p57, %p58
    %p61 = scmp.ne.s32.totalorder %s46, %s60
    %p62 = scmp.eq.s32.totalorder %s15, 0
    %p63 = por %p61, %p62
    %s65 = sadd.s32 %s64, 1
    %p68 = scmp.eq.s32.totalorder %s9, 1
    %p69 = scmp.ne.s32.totalorder %s64, %s66
    %p70 = scmp.eq.s32.totalorder %s9, 0
    %p71 = por %p69, %p70
    %p72 = scmp.ne.s32.totalorder %s64, %s66
    %p73 = scmp.eq.s32.totalorder %s14, 1
    %p74 = por %p72, %p73
    %p75 = scmp.ne.s32.totalorder %s66, %s67
    %p76 = scmp.eq.s32.totalorder %s14, 0
    %p77 = por %p75, %p76
    %p78 = scmp.ne.s32.totalorder %s66, %s67
    %p79 = scmp.eq.s32.totalorder %s15, 1
    %p80 = por %p78, %p79
    %p82 = scmp.ne.s32.totalorder %s67, %s81
    %p83 = scmp.eq.s32.totalorder %s15, 0
    %p84 = por %p82, %p83
    %s85 = ssub.s32 %s9, %s16
    %p86 = scmp.eq.s32.totalorder %s85, 0
    %s88 = sadd.s32 %s87, 1
    %s89 = scalar_select %p86, %s87, %s88
    %p92 = pneg %p86
    %p93 = scmp.eq.s32.totalorder %s9, 1
    %p94 = por %p92, %p93
    %p95 = scmp.ne.s32.totalorder %s87, %s90
    %p96 = scmp.eq.s32.totalorder %s9, 0
    %p97 = por %p95, %p96
    %p98 = scmp.ne.s32.totalorder %s87, %s90
    %p99 = scmp.eq.s32.totalorder %s14, 1
    %p100 = por %p98, %p99
    %p101 = scmp.ne.s32.totalorder %s90, %s91
    %p102 = scmp.eq.s32.totalorder %s14, 0
    %p103 = por %p101, %p102
    %p104 = scmp.ne.s32.totalorder %s90, %s91
    %p105 = scmp.eq.s32.totalorder %s15, 1
    %p106 = por %p104, %p105
    %p108 = scmp.ne.s32.totalorder %s91, %s107
    %p109 = scmp.eq.s32.totalorder %s15, 0
    %p110 = por %p108, %p109
    %p111 = scmp.le.s32.totalorder 1, %s9
    %p112 = scmp.lt.s32.totalorder %s9, 3
    %p113 = pnand %p111, %p112
    %p114 = pneg %p113
    // Predicated region
    $region9: #{block_forward.6} parent=5 // pred_check
      _
    $region10: #{block_forward.6} parent=5 // pred_check_branch
      %116 = sbr.rel (%p113) target = $region12
    $region11: #{block_forward.6} parent=5 // pred_region
      %s117 = ssub.s32 %s9, 1
      // Predicated region
      $region13: #{block_forward.6} parent=11 // pred_check
        %p118 = pneg %p56
      $region14: #{block_forward.6} parent=11 // pred_check_branch
        %120 = sbr.rel (%p118) target = $region16
      $region15: #{block_forward.6} parent=11 // pred_region
        _
      $region16: #{block_forward.6} parent=11 // pred_fallthru
        _
      // Predicated region
      $region17: #{block_forward.6} parent=11 // pred_check
        %p121 = pneg %p77
      $region18: #{block_forward.6} parent=11 // pred_check_branch
        %123 = sbr.rel (%p121) target = $region20
      $region19: #{block_forward.6} parent=11 // pred_region
        _
      $region20: #{block_forward.6} parent=11 // pred_fallthru
        _
    $region12: #{block_forward.6} parent=5 // pred_fallthru
      _
    %p124 = scmp.lt.s32.totalorder %s9, 2
    // Predicated region
    $region21: #{block_forward.6} parent=5 // pred_check
      %p125 = pneg %p124
    $region22: #{block_forward.6} parent=5 // pred_check_branch
      %127 = sbr.rel (%p125) target = $region24
    $region23: #{block_forward.6} parent=5 // pred_region
      // Predicated region
      $region25: #{block_forward.6} parent=23 // pred_check
        %p128 = pneg %p29
      $region26: #{block_forward.6} parent=23 // pred_check_branch
        %130 = sbr.rel (%p128) target = $region28
      $region27: #{block_forward.6} parent=23 // pred_region
        %p131 = scmp.lt.s32.totalorder %s9, 1
        %s132 = scalar_select %p131, %s9, 1
        %s133 = smul.addr %s132, 2
        %s134 = smul.addr %s133, 8
        %s135 = scalar_lea.vmem %s0, %s134
      $region28: #{block_forward.6} parent=23 // pred_fallthru
        _
    $region24: #{block_forward.6} parent=5 // pred_fallthru
      _
    %p136 = scmp.le.s32.totalorder 1, %s9
    %p137 = scmp.lt.s32.totalorder %s9, 3
    %p138 = pnand %p136, %p137
    %p139 = pneg %p138
    // Predicated region
    $region29: #{block_forward.6} parent=5 // pred_check
      _
    $region30: #{block_forward.6} parent=5 // pred_check_branch
      %141 = sbr.rel (%p138) target = $region32
    $region31: #{block_forward.6} parent=5 // pred_region
      %s142 = ssub.s32 %s9, 1
      %p143 = scmp.lt.s32.totalorder %s14, 1
      %s144 = scalar_select %p143, %s14, 1
      %s145 = smul.addr %s144, 2
      %s146 = smul.addr %s145, 8
      %s147 = scalar_lea.vmem %s0, %s146
      %p148 = pneg %p35
      %p149 = pneg %p32
      %p150 = pneg %p56
      %p151 = pneg %p53
      %p152 = pneg %p77
      %p153 = pneg %p74
      %p154 = pneg %p103
      %p155 = pneg %p100
      %p156 = scmp.lt.s32.totalorder %s14, 1
      %s157 = scalar_select %p156, %s14, 1
      %s158 = smul.addr %s157, 2
      %s159 = smul.addr %s158, 8
      %s160 = scalar_lea.vmem %s3, %s159
      %p161 = scmp.lt.s32.totalorder %s14, 1
      %s162 = scalar_select %p161, %s14, 1
      %s163 = smul.addr %s162, 2
      %s164 = smul.addr %s163, 8
      %s165 = scalar_lea.vmem %s0, %s164
      %p166 = scmp.lt.s32.totalorder %s14, 1
      %s167 = scalar_select %p166, %s14, 1
      %s168 = smul.addr %s167, 2
      %s169 = smul.addr %s168, 8
      %s170 = scalar_lea.vmem %s3, %s169
      %v171 = vld [vmem:[%s165] sm:$0xff]
      %v172 = vld [vmem:[%s165 + $0x8] sm:$0xff]
      %v173 = vld [vmem:[%s1] sm:$0xff]
      %v174 = vld [vmem:[%s1 + $0x8] sm:$0xff]
      %v175 = vld [vmem:[%s2] sm:$0xff]
      %v176 = vld [vmem:[%s2 + $0x8] sm:$0xff]
      %vm177 = vcmask 130048
      %v179 = vsel %vm177, %v173, 0
      %v182 = vsel %vm177, %v174, 0
      %184 = vmatpush.msra.mxu0 0.0
      %185 = vmatpush.msra.mxu0 0.0
      %186 = vmatpush.msra.mxu0 0.0
      %187 = vmatpush.msra.mxu0 0.0
      %188 = vmatpush.msra.mxu0 0.0
      %189 = vmatpush.msra.mxu0 0.0
      %190 = vmatpush.msra.mxu0 0.0
      %191 = vmatpush.msra.mxu0 0.0
      %192 = vmatpush.msra.mxu0 0.0
      %193 = vmatpush.msra.mxu0 0.0
      %194 = vmatpush.msra.mxu0 0.0
      %195 = vmatpush.msra.mxu0 0.0
      %196 = vmatpush.msra.mxu0 0.0
      %197 = vmatpush.msra.mxu0 0.0
      %198 = vmatpush.msra.mxu0 %v172
      %199 = vmatpush.msra.mxu0 %v171
      %200 = vmatmul.f32.gmra.mxu0 %v179
      %v201 = vpop.f32.mrf.mxu0
      %v202 = vadd.f32 0.0, %v201
      %203 = vmatmul.f32.gmra.mxu0 %v182
      %v204 = vpop.f32.mrf.mxu0
      %v205 = vadd.f32 0.0, %v204
      %206 = vdwg.mxu0
      %v208 = vsel %vm177, %v175, 0
      %v211 = vsel %vm177, %v176, 0
      %213 = vmatpush.msra.mxu0 0.0
      %214 = vmatpush.msra.mxu0 0.0
      %215 = vmatpush.msra.mxu0 0.0
      %216 = vmatpush.msra.mxu0 0.0
      %217 = vmatpush.msra.mxu0 0.0
      %218 = vmatpush.msra.mxu0 0.0
      %219 = vmatpush.msra.mxu0 0.0
      %220 = vmatpush.msra.mxu0 0.0
      %221 = vmatpush.msra.mxu0 0.0
      %222 = vmatpush.msra.mxu0 0.0
      %223 = vmatpush.msra.mxu0 0.0
      %224 = vmatpush.msra.mxu0 0.0
      %225 = vmatpush.msra.mxu0 0.0
      %226 = vmatpush.msra.mxu0 0.0
      %227 = vmatpush.msra.mxu0 %v172
      %228 = vmatpush.msra.mxu0 %v171
      %229 = vmatmul.f32.gmra.mxu0 %v208
      %v230 = vpop.f32.mrf.mxu0
      %v231 = vadd.f32 0.0, %v230
      %232 = vmatmul.f32.gmra.mxu0 %v211
      %v233 = vpop.f32.mrf.mxu0
      %v234 = vadd.f32 0.0, %v233
      %235 = vdwg.mxu0
      %238 = vrot.lane.b32.xlu0 %v202, 96
      %v239 = vpop.permute.xlu0 %238
      %240 = vrot.lane.b32.xlu0 %v205, 96
      %v241 = vpop.permute.xlu0 %240
      %v244 = vmul.f32 %v202, %v239
      %v245 = vmul.f32 %v205, %v241
      %248 = vrot.lane.b32.xlu0 %v231, 96
      %v249 = vpop.permute.xlu0 %248
      %250 = vrot.lane.b32.xlu0 %v234, 96
      %v251 = vpop.permute.xlu0 %250
      %v254 = vmul.f32 %v231, %v249
      %v255 = vmul.f32 %v234, %v251
      %v256 = vadd.f32 %v244, %v254
      %v257 = vadd.f32 %v245, %v255
      %v258 = vmul.f32 %v202, %v249
      %v259 = vmul.f32 %v205, %v251
      %v260 = vmul.f32 %v231, %v239
      %v261 = vmul.f32 %v234, %v241
      %v262 = vsub.f32 %v258, %v260
      %v263 = vsub.f32 %v259, %v261
      %264 = vmatpush.msra.mxu0 0.0
      %265 = vmatpush.msra.mxu0 0.0
      %266 = vmatpush.msra.mxu0 0.0
      %267 = vmatpush.msra.mxu0 0.0
      %268 = vmatpush.msra.mxu0 0.0
      %269 = vmatpush.msra.mxu0 0.0
      %270 = vmatpush.msra.mxu0 0.0
      %271 = vmatpush.msra.mxu0 0.0
      %272 = vmatpush.msra.mxu0 0.0
      %273 = vmatpush.msra.mxu0 0.0
      %274 = vmatpush.msra.mxu0 0.0
      %275 = vmatpush.msra.mxu0 0.0
      %276 = vmatpush.msra.mxu0 0.0
      %277 = vmatpush.msra.mxu0 0.0
      %278 = vmatpush.msra.mxu0 %v257
      %279 = vmatpush.msra.mxu0 %v256
      %280 = vmatmul.f32.gmra.mxu0 %v179
      %v281 = vpop.f32.mrf.mxu0
      %v282 = vadd.f32 0.0, %v281
      %283 = vmatmul.f32.gmra.mxu0 %v182
      %v284 = vpop.f32.mrf.mxu0
      %v285 = vadd.f32 0.0, %v284
      %286 = vdwg.mxu0
      %287 = vmatpush.msra.mxu0 0.0
      %288 = vmatpush.msra.mxu0 0.0
      %289 = vmatpush.msra.mxu0 0.0
      %290 = vmatpush.msra.mxu0 0.0
      %291 = vmatpush.msra.mxu0 0.0
      %292 = vmatpush.msra.mxu0 0.0
      %293 = vmatpush.msra.mxu0 0.0
      %294 = vmatpush.msra.mxu0 0.0
      %295 = vmatpush.msra.mxu0 0.0
      %296 = vmatpush.msra.mxu0 0.0
      %297 = vmatpush.msra.mxu0 0.0
      %298 = vmatpush.msra.mxu0 0.0
      %299 = vmatpush.msra.mxu0 0.0
      %300 = vmatpush.msra.mxu0 0.0
      %301 = vmatpush.msra.mxu0 %v263
      %302 = vmatpush.msra.mxu0 %v262
      %303 = vmatmul.f32.gmra.mxu0 %v208
      %v304 = vpop.f32.mrf.mxu0
      %v305 = vadd.f32 0.0, %v304
      %306 = vmatmul.f32.gmra.mxu0 %v211
      %v307 = vpop.f32.mrf.mxu0
      %v308 = vadd.f32 0.0, %v307
      %309 = vdwg.mxu0
      %v310 = vsub.f32 %v282, %v305
      %v311 = vsub.f32 %v285, %v308
      %vm312 = vcmask 261120
      %v313 = vsel %vm312, %v310, 0.0
      %314 = vadd.xlane.f32.xlu0 %v313
      %v315 = vpop.xlane.xlu0 %314
      %v316 = vsel %vm312, %v311, 0.0
      %317 = vadd.xlane.f32.xlu0 %v316
      %v318 = vpop.xlane.xlu0 %317
      %v319 = vmul.f32 %v315, 0.001953125
      %v320 = vmul.f32 %v318, 0.001953125
      %vm321 = vcmask 7168
      %322 = vst.msk [vmem:[%s170] sm:$0xff] %vm321, %v319
      %323 = vst.msk [vmem:[%s170 + $0x8] sm:$0xff] %vm321, %v320
      %p324 = scmp.lt.s32.totalorder %s14, 1
      %s325 = scalar_select %p324, %s14, 1
      %s326 = smul.addr %s325, 2
      %s327 = smul.addr %s326, 8
      %s328 = scalar_lea.vmem %s3, %s327
      // Predicated region
      $region33: #{block_forward.6} parent=31 // pred_check
        %p329 = pneg %p100
      $region34: #{block_forward.6} parent=31 // pred_check_branch
        %331 = sbr.rel (%p329) target = $region36
      $region35: #{block_forward.6} parent=31 // pred_region
        _
      $region36: #{block_forward.6} parent=31 // pred_fallthru
        _
    $region32: #{block_forward.6} parent=5 // pred_fallthru
      _
    %p332 = scmp.le.s32.totalorder 2, %s9
    // Predicated region
    $region37: #{block_forward.6} parent=5 // pred_check
      %p333 = pneg %p332
    $region38: #{block_forward.6} parent=5 // pred_check_branch
      %335 = sbr.rel (%p333) target = $region40
    $region39: #{block_forward.6} parent=5 // pred_region
      %s336 = ssub.s32 %s9, 2
      // Predicated region
      $region41: #{block_forward.6} parent=39 // pred_check
        %p337 = pneg %p106
      $region42: #{block_forward.6} parent=39 // pred_check_branch
        %339 = sbr.rel (%p337) target = $region44
      $region43: #{block_forward.6} parent=39 // pred_region
        %p340 = scmp.lt.s32.totalorder %s15, 1
        %s341 = scalar_select %p340, %s15, 1
        %s342 = smul.addr %s341, 2
        %s343 = smul.addr %s342, 8
        %s344 = scalar_lea.vmem %s3, %s343
      $region44: #{block_forward.6} parent=39 // pred_fallthru
        _
    $region40: #{block_forward.6} parent=5 // pred_fallthru
      _
  $region6: #{block_forward.6} parent=0 // loop_footer
    %s13 = sadd.s32 1, %s9
  $region7: #{block_forward.6} parent=0 // loop_footer_branch
    %8 = sbr.rel target = $region3
  $region8: #{block_forward.6} parent=0 // loop_exit
    _

// kernel: block_forward.7
$region0: #{block_forward.7}
  #allocation0 [shape = 'u32[]', space=smem, size = 0x4, offset = 0x4, fixed_abs, tag = 'smem constant byte address 0x4 - core index']
  #allocation1 [shape = 'u32[72,128]{1,0:T(1,128)}', space=vmem, size = 0x9000, scoped, tag = 'internal scratch']
  %s0 = inlined_call_operand.vmem [shape: f32[2,16,16], index: 0, kind: input, shape index: {}]
  %s1 = inlined_call_operand.vmem [shape: f32[2,16,96], index: 1, kind: input, shape index: {}]
  %s2 = inlined_call_operand.vmem [shape: f32[2,16,32], index: 2, kind: output, shape index: {}]
  %s3 = sld [smem:[#allocation0]]
  $region41: #{block_forward.7} parent=0
    _
  %s5 = ssub.s32 1, %s3
  %s6 = scalar_select 0, %s5, %s3
  loop: start=0, step=1, limit=4
  $region2: #{block_forward.7} parent=0 // loop_pre_header
    _
  $region3: #{block_forward.7} parent=0 // loop_header
    %s8 = sphi 0, %s12
    %p9 = scmp.ge.s32.totalorder %s8, 4
    %s18 = sphi 0, %s20
    %s21 = sphi 0, %s18
    %s22 = sphi 0, %s21
    %s38 = sphi 0, %s22
    %s44 = sphi 0, %s46
    %s47 = sphi 0, %s44
    %s48 = sphi 0, %s47
    %s64 = sphi 0, %s48
    %s70 = sphi 0, %s72
    %s73 = sphi 0, %s70
    %s74 = sphi 0, %s73
    %s90 = sphi 0, %s74
  $region4: #{block_forward.7} parent=0 // loop_header_branch
    %11 = sbr.rel (%p9) target = $region8
  $region5: #{block_forward.7} parent=0 // loop_body
    %s13 = ssub.s32 %s8, 1
    %s14 = ssub.s32 %s8, 2
    %s15 = sadd.s32 %s8, 1
    %s16 = ssub.s32 %s8, %s15
    %p17 = scmp.eq.s32.totalorder %s16, 0
    %s19 = sadd.s32 %s18, 1
    %s20 = scalar_select %p17, %s18, %s19
    %p23 = pneg %p17
    %p24 = scmp.eq.s32.totalorder %s8, 1
    %p25 = por %p23, %p24
    %p26 = scmp.ne.s32.totalorder %s18, %s21
    %p27 = scmp.eq.s32.totalorder %s8, 0
    %p28 = por %p26, %p27
    %p29 = scmp.ne.s32.totalorder %s18, %s21
    %p30 = scmp.eq.s32.totalorder %s13, 1
    %p31 = por %p29, %p30
    %p32 = scmp.ne.s32.totalorder %s21, %s22
    %p33 = scmp.eq.s32.totalorder %s13, 0
    %p34 = por %p32, %p33
    %p35 = scmp.ne.s32.totalorder %s21, %s22
    %p36 = scmp.eq.s32.totalorder %s14, 1
    %p37 = por %p35, %p36
    %p39 = scmp.ne.s32.totalorder %s22, %s38
    %p40 = scmp.eq.s32.totalorder %s14, 0
    %p41 = por %p39, %p40
    %s42 = ssub.s32 %s8, %s15
    %p43 = scmp.eq.s32.totalorder %s42, 0
    %s45 = sadd.s32 %s44, 1
    %s46 = scalar_select %p43, %s44, %s45
    %p49 = pneg %p43
    %p50 = scmp.eq.s32.totalorder %s8, 1
    %p51 = por %p49, %p50
    %p52 = scmp.ne.s32.totalorder %s44, %s47
    %p53 = scmp.eq.s32.totalorder %s8, 0
    %p54 = por %p52, %p53
    %p55 = scmp.ne.s32.totalorder %s44, %s47
    %p56 = scmp.eq.s32.totalorder %s13, 1
    %p57 = por %p55, %p56
    %p58 = scmp.ne.s32.totalorder %s47, %s48
    %p59 = scmp.eq.s32.totalorder %s13, 0
    %p60 = por %p58, %p59
    %p61 = scmp.ne.s32.totalorder %s47, %s48
    %p62 = scmp.eq.s32.totalorder %s14, 1
    %p63 = por %p61, %p62
    %p65 = scmp.ne.s32.totalorder %s48, %s64
    %p66 = scmp.eq.s32.totalorder %s14, 0
    %p67 = por %p65, %p66
    %s68 = ssub.s32 %s8, %s15
    %p69 = scmp.eq.s32.totalorder %s68, 0
    %s71 = sadd.s32 %s70, 1
    %s72 = scalar_select %p69, %s70, %s71
    %p75 = pneg %p69
    %p76 = scmp.eq.s32.totalorder %s8, 1
    %p77 = por %p75, %p76
    %p78 = scmp.ne.s32.totalorder %s70, %s73
    %p79 = scmp.eq.s32.totalorder %s8, 0
    %p80 = por %p78, %p79
    %p81 = scmp.ne.s32.totalorder %s70, %s73
    %p82 = scmp.eq.s32.totalorder %s13, 1
    %p83 = por %p81, %p82
    %p84 = scmp.ne.s32.totalorder %s73, %s74
    %p85 = scmp.eq.s32.totalorder %s13, 0
    %p86 = por %p84, %p85
    %p87 = scmp.ne.s32.totalorder %s73, %s74
    %p88 = scmp.eq.s32.totalorder %s14, 1
    %p89 = por %p87, %p88
    %p91 = scmp.ne.s32.totalorder %s74, %s90
    %p92 = scmp.eq.s32.totalorder %s14, 0
    %p93 = por %p91, %p92
    %p94 = scmp.le.s32.totalorder 1, %s8
    %p95 = scmp.lt.s32.totalorder %s8, 3
    %p96 = pnand %p94, %p95
    %p97 = pneg %p96
    // Predicated region
    $region9: #{block_forward.7} parent=5 // pred_check
      _
    $region10: #{block_forward.7} parent=5 // pred_check_branch
      %99 = sbr.rel (%p96) target = $region12
    $region11: #{block_forward.7} parent=5 // pred_region
      %s100 = ssub.s32 %s8, 1
    $region12: #{block_forward.7} parent=5 // pred_fallthru
      _
    %p101 = scmp.lt.s32.totalorder %s8, 2
    // Predicated region
    $region13: #{block_forward.7} parent=5 // pred_check
      %p102 = pneg %p101
    $region14: #{block_forward.7} parent=5 // pred_check_branch
      %104 = sbr.rel (%p102) target = $region16
    $region15: #{block_forward.7} parent=5 // pred_region
      // Predicated region
      $region17: #{block_forward.7} parent=15 // pred_check
        %p105 = pneg %p28
      $region18: #{block_forward.7} parent=15 // pred_check_branch
        %107 = sbr.rel (%p105) target = $region20
      $region19: #{block_forward.7} parent=15 // pred_region
        %p108 = scmp.lt.s32.totalorder %s8, 1
        %s109 = scalar_select %p108, %s8, 1
        %s110 = smul.addr %s109, 2
        %s111 = smul.addr %s110, 8
        %s112 = scalar_lea.vmem %s0, %s111
      $region20: #{block_forward.7} parent=15 // pred_fallthru
        _
      // Predicated region
      $region21: #{block_forward.7} parent=15 // pred_check
        %p113 = pneg %p54
      $region22: #{block_forward.7} parent=15 // pred_check_branch
        %115 = sbr.rel (%p113) target = $region24
      $region23: #{block_forward.7} parent=15 // pred_region
        %p116 = scmp.lt.s32.totalorder %s8, 1
        %s117 = scalar_select %p116, %s8, 1
        %s118 = smul.addr %s117, 2
        %s119 = smul.addr %s118, 8
        %s120 = scalar_lea.vmem %s1, %s119
      $region24: #{block_forward.7} parent=15 // pred_fallthru
        _
    $region16: #{block_forward.7} parent=5 // pred_fallthru
      _
    %p121 = scmp.le.s32.totalorder 1, %s8
    %p122 = scmp.lt.s32.totalorder %s8, 3
    %p123 = pnand %p121, %p122
    %p124 = pneg %p123
    // Predicated region
    $region25: #{block_forward.7} parent=5 // pred_check
      _
    $region26: #{block_forward.7} parent=5 // pred_check_branch
      %126 = sbr.rel (%p123) target = $region28
    $region27: #{block_forward.7} parent=5 // pred_region
      %s127 = ssub.s32 %s8, 1
      %p128 = scmp.lt.s32.totalorder %s13, 1
      %s129 = scalar_select %p128, %s13, 1
      %s130 = smul.addr %s129, 2
      %s131 = smul.addr %s130, 8
      %s132 = scalar_lea.vmem %s0, %s131
      %p133 = pneg %p34
      %p134 = pneg %p31
      %p135 = scmp.lt.s32.totalorder %s13, 1
      %s136 = scalar_select %p135, %s13, 1
      %s137 = smul.addr %s136, 2
      %s138 = smul.addr %s137, 8
      %s139 = scalar_lea.vmem %s1, %s138
      %p140 = pneg %p60
      %p141 = pneg %p57
      %p142 = pneg %p86
      %p143 = pneg %p83
      %p144 = scmp.lt.s32.totalorder %s13, 1
      %s145 = scalar_select %p144, %s13, 1
      %s146 = smul.addr %s145, 2
      %s147 = smul.addr %s146, 8
      %s148 = scalar_lea.vmem %s2, %s147
      %p149 = scmp.lt.s32.totalorder %s13, 1
      %s150 = scalar_select %p149, %s13, 1
      %s151 = smul.addr %s150, 2
      %s152 = smul.addr %s151, 8
      %s153 = scalar_lea.vmem %s0, %s152
      %p154 = scmp.lt.s32.totalorder %s13, 1
      %s155 = scalar_select %p154, %s13, 1
      %s156 = smul.addr %s155, 2
      %s157 = smul.addr %s156, 8
      %s158 = scalar_lea.vmem %s1, %s157
      %p159 = scmp.lt.s32.totalorder %s13, 1
      %s160 = scalar_select %p159, %s13, 1
      %s161 = smul.addr %s160, 2
      %s162 = smul.addr %s161, 8
      %s163 = scalar_lea.vmem %s2, %s162
      %v164 = vld [vmem:[%s158] sm:$0xff]
      %v165 = vld [vmem:[%s158 + $0x8] sm:$0xff]
      %v166 = vld [vmem:[%s153] sm:$0xff]
      %v167 = vld [vmem:[%s153 + $0x8] sm:$0xff]
      %170 = vrot.lane.b32.xlu0 %v164, 64
      %v171 = vpop.permute.xlu0 %170
      %172 = vrot.lane.b32.xlu0 %v165, 64
      %v173 = vpop.permute.xlu0 %172
      %vm176 = vcmask 130048
      %v178 = vsel %vm176, %v166, 0
      %v181 = vsel %vm176, %v167, 0
      %183 = vmatpush.msra.mxu0 0.0
      %184 = vmatpush.msra.mxu0 0.0
      %185 = vmatpush.msra.mxu0 0.0
      %186 = vmatpush.msra.mxu0 0.0
      %187 = vmatpush.msra.mxu0 0.0
      %188 = vmatpush.msra.mxu0 0.0
      %189 = vmatpush.msra.mxu0 0.0
      %190 = vmatpush.msra.mxu0 0.0
      %191 = vmatpush.msra.mxu0 0.0
      %192 = vmatpush.msra.mxu0 0.0
      %193 = vmatpush.msra.mxu0 0.0
      %194 = vmatpush.msra.mxu0 0.0
      %195 = vmatpush.msra.mxu0 0.0
      %196 = vmatpush.msra.mxu0 0.0
      %197 = vmatpush.msra.mxu0 %v173
      %198 = vmatpush.msra.mxu0 %v171
      %199 = vmatmul.f32.gmra.mxu0 %v178
      %v200 = vpop.f32.mrf.mxu0
      %v201 = vadd.f32 0.0, %v200
      %202 = vmatmul.f32.gmra.mxu0 %v181
      %v203 = vpop.f32.mrf.mxu0
      %v204 = vadd.f32 0.0, %v203
      %205 = vdwg.mxu0
      %vm206 = vcmask 261120
      %207 = vst.msk [vmem:[%s163] sm:$0xff] %vm206, %v201
      %208 = vst.msk [vmem:[%s163 + $0x8] sm:$0xff] %vm206, %v204
      %p209 = scmp.lt.s32.totalorder %s13, 1
      %s210 = scalar_select %p209, %s13, 1
      %s211 = smul.addr %s210, 2
      %s212 = smul.addr %s211, 8
      %s213 = scalar_lea.vmem %s2, %s212
      // Predicated region
      $region29: #{block_forward.7} parent=27 // pred_check
        %p214 = pneg %p83
      $region30: #{block_forward.7} parent=27 // pred_check_branch
        %216 = sbr.rel (%p214) target = $region32
      $region31: #{block_forward.7} parent=27 // pred_region
        _
      $region32: #{block_forward.7} parent=27 // pred_fallthru
        _
    $region28: #{block_forward.7} parent=5 // pred_fallthru
      _
    %p217 = scmp.le.s32.totalorder 2, %s8
    // Predicated region
    $region33: #{block_forward.7} parent=5 // pred_check
      %p218 = pneg %p217
    $region34: #{block_forward.7} parent=5 // pred_check_branch
      %220 = sbr.rel (%p218) target = $region36
    $region35: #{block_forward.7} parent=5 // pred_region
      %s221 = ssub.s32 %s8, 2
      // Predicated region
      $region37: #{block_forward.7} parent=35 // pred_check
        %p222 = pneg %p89
      $region38: #{block_forward.7} parent=35 // pred_check_branch
        %224 = sbr.rel (%p222) target = $region40
      $region39: #{block_forward.7} parent=35 // pred_region
        %p225 = scmp.lt.s32.totalorder %s14, 1
        %s226 = scalar_select %p225, %s14, 1
        %s227 = smul.addr %s226, 2
        %s228 = smul.addr %s227, 8
        %s229 = scalar_lea.vmem %s2, %s228
      $region40: #{block_forward.7} parent=35 // pred_fallthru
        _
    $region36: #{block_forward.7} parent=5 // pred_fallthru
      _
  $region6: #{block_forward.7} parent=0 // loop_footer
    %s12 = sadd.s32 1, %s8
  $region7: #{block_forward.7} parent=0 // loop_footer_branch
    %7 = sbr.rel target = $region3
  $region8: #{block_forward.7} parent=0 // loop_exit
    _

// kernel: block_forward.8
$region0: #{block_forward.8}
  #allocation0 [shape = 'u32[]', space=smem, size = 0x4, offset = 0x4, fixed_abs, tag = 'smem constant byte address 0x4 - core index']
  #allocation1 [shape = 'u32[72,128]{1,0:T(1,128)}', space=vmem, size = 0x9000, scoped, tag = 'internal scratch']
  %s0 = inlined_call_operand.vmem [shape: f32[32,32], index: 0, kind: input, shape index: {}]
  %s1 = inlined_call_operand.vmem [shape: f32[32,32], index: 1, kind: input, shape index: {}]
  %s2 = inlined_call_operand.vmem [shape: bf16[32,32], index: 2, kind: input, shape index: {}]
  %s3 = inlined_call_operand.vmem [shape: f32[1,32], index: 3, kind: input, shape index: {}]
  %s4 = inlined_call_operand.vmem [shape: f32[32,32], index: 4, kind: output, shape index: {}]
  %s5 = sld [smem:[#allocation0]]
  $region26: #{block_forward.8} parent=0
    _
  %s7 = ssub.s32 1, %s5
  %s8 = scalar_select 0, %s7, %s5
  // Predicated region
  $region2: #{block_forward.8} parent=0 // pred_check
    _
  $region3: #{block_forward.8} parent=0 // pred_check_branch
    %10 = sbr.rel (0) target = $region5
  $region4: #{block_forward.8} parent=0 // pred_region
    _
  $region5: #{block_forward.8} parent=0 // pred_fallthru
    _
  // Predicated region
  $region6: #{block_forward.8} parent=0 // pred_check
    _
  $region7: #{block_forward.8} parent=0 // pred_check_branch
    %12 = sbr.rel (0) target = $region9
  $region8: #{block_forward.8} parent=0 // pred_region
    _
  $region9: #{block_forward.8} parent=0 // pred_fallthru
    _
  // Predicated region
  $region10: #{block_forward.8} parent=0 // pred_check
    _
  $region11: #{block_forward.8} parent=0 // pred_check_branch
    %14 = sbr.rel (0) target = $region13
  $region12: #{block_forward.8} parent=0 // pred_region
    _
  $region13: #{block_forward.8} parent=0 // pred_fallthru
    _
  // Predicated region
  $region14: #{block_forward.8} parent=0 // pred_check
    _
  $region15: #{block_forward.8} parent=0 // pred_check_branch
    %16 = sbr.rel (0) target = $region17
  $region16: #{block_forward.8} parent=0 // pred_region
    _
  $region17: #{block_forward.8} parent=0 // pred_fallthru
    _
  %v18 = vld [vmem:[%s1] sm:$0xff]
  %v19 = vld [vmem:[%s1 + $0x8] sm:$0xff]
  %v20 = vld [vmem:[%s1 + $0x10] sm:$0xff]
  %v21 = vld [vmem:[%s1 + $0x18] sm:$0xff]
  %v22 = vld [vmem:[%s0] sm:$0xff]
  %v23 = vld [vmem:[%s0 + $0x8] sm:$0xff]
  %v24 = vld [vmem:[%s0 + $0x10] sm:$0xff]
  %v25 = vld [vmem:[%s0 + $0x18] sm:$0xff]
  %v26 = vpack.c.bf16 %v23, %v22
  %v27 = vpack.c.bf16 %v25, %v24
  %v28 = vld [vmem:[%s2] sm:$0xf]
  %v29 = vld [vmem:[%s2 + $0x4] sm:$0xf]
  %v30 = vld [vmem:[%s2 + $0x8] sm:$0xf]
  %v31 = vld [vmem:[%s2 + $0xc] sm:$0xf]
  %v36 = vunpack.c.l.b16 %v28
  %v37 = vunpack.c.l.b16 %v29
  %v38 = vunpack.c.l.b16 %v30
  %v39 = vunpack.c.l.b16 %v31
  %v40 = vpack.c.b16 %v37, %v36
  %v41 = vpack.c.b16 %v39, %v38
  %vm44 = vcmask 261120
  %v46 = vsel %vm44, %v26, 0
  %v49 = vsel %vm44, %v27, 0
  %51 = vmatpush.bf16.msra.mxu0 0
  %52 = vmatpush.bf16.msra.mxu0 0
  %53 = vmatpush.bf16.msra.mxu0 0
  %54 = vmatpush.bf16.msra.mxu0 0
  %55 = vmatpush.bf16.msra.mxu0 0
  %56 = vmatpush.bf16.msra.mxu0 0
  %57 = vmatpush.bf16.msra.mxu0 %v41
  %58 = vmatpush.bf16.msra.mxu0 %v40
  %59 = vmatmul.bf16.gmra.mxu0 %v46
  %v60 = vpop.f32.mrf.mxu0
  %v61 = vadd.f32 0.0, %v60
  %v62 = vpop.f32.mrf.mxu0
  %v63 = vadd.f32 0.0, %v62
  %64 = vmatmul.bf16.gmra.mxu0 %v49
  %v65 = vpop.f32.mrf.mxu0
  %v66 = vadd.f32 0.0, %v65
  %v67 = vpop.f32.mrf.mxu0
  %v68 = vadd.f32 0.0, %v67
  %69 = vdwg.mxu0
  %v70 = vadd.f32 %v18, %v61
  %v71 = vadd.f32 %v19, %v63
  %v72 = vadd.f32 %v20, %v66
  %v73 = vadd.f32 %v21, %v68
  %v74 = vld [vmem:[%s3] sm:$0x1]
  %v76 = vperm.slane %v74, 0
  %v78 = vadd.f32 %v70, %v76
  %v79 = vadd.f32 %v71, %v76
  %v80 = vadd.f32 %v72, %v76
  %v81 = vadd.f32 %v73, %v76
  %82 = vst.msk [vmem:[%s4] sm:$0xff] %vm44, %v78
  %83 = vst.msk [vmem:[%s4 + $0x8] sm:$0xff] %vm44, %v79
  %84 = vst.msk [vmem:[%s4 + $0x10] sm:$0xff] %vm44, %v80
  %85 = vst.msk [vmem:[%s4 + $0x18] sm:$0xff] %vm44, %v81
  // Predicated region
  $region18: #{block_forward.8} parent=0 // pred_check
    _
  $region19: #{block_forward.8} parent=0 // pred_check_branch
    %87 = sbr.rel (0) target = $region21
  $region20: #{block_forward.8} parent=0 // pred_region
    _
  $region21: #{block_forward.8} parent=0 // pred_fallthru
    _
  // Predicated region
  $region22: #{block_forward.8} parent=0 // pred_check
    _
  $region23: #{block_forward.8} parent=0 // pred_check_branch
    %89 = sbr.rel (0) target = $region25
  $region24: #{block_forward.8} parent=0 // pred_region
    _
  $region25: #{block_forward.8} parent=0 // pred_fallthru
    _

// kernel: block_forward.9
$region0: #{block_forward.9}
  #allocation0 [shape = 'u32[]', space=smem, size = 0x4, offset = 0x4, fixed_abs, tag = 'smem constant byte address 0x4 - core index']
  #allocation1 [shape = 'u32[72,128]{1,0:T(1,128)}', space=vmem, size = 0x9000, scoped, tag = 'internal scratch']
  %s0 = inlined_call_operand.vmem [shape: f32[32,32], index: 0, kind: input, shape index: {}]
  %s1 = inlined_call_operand.vmem [shape: f32[1,32], index: 1, kind: input, shape index: {}]
  %s2 = inlined_call_operand.vmem [shape: f32[1,32], index: 2, kind: input, shape index: {}]
  %s3 = inlined_call_operand.vmem [shape: bf16[32,128], index: 3, kind: input, shape index: {}]
  %s4 = inlined_call_operand.vmem [shape: f32[1,128], index: 4, kind: input, shape index: {}]
  %s5 = inlined_call_operand.vmem [shape: bf16[128,32], index: 5, kind: input, shape index: {}]
  %s6 = inlined_call_operand.vmem [shape: f32[1,32], index: 6, kind: input, shape index: {}]
  %s7 = inlined_call_operand.hbm [shape: f32[32,32], index: 7, kind: output, shape index: {}]
  %s8 = sld [smem:[#allocation0]]
  $region38: #{block_forward.9} parent=0
    _
  %s10 = ssub.s32 1, %s8
  %s11 = scalar_select 0, %s10, %s8
  $region1: #{block_forward.9} parent=0
    #allocation2 [shape = 'u8[16384]{0}', space=vmem, size = 0x4000, scoped, tag = 'output window, operand 0, single buffered']
    #allocation3 [shape = 's32[1]{0}', space=sflag, size = 0x4, scoped, tag = 'scoped memory for block_forward.9']
    %12 = vsyncpa [#allocation3], 0
    // Predicated region
    $region2: #{block_forward.9} parent=1 // pred_check
      _
    $region3: #{block_forward.9} parent=1 // pred_check_branch
      %14 = sbr.rel (0) target = $region5
    $region4: #{block_forward.9} parent=1 // pred_region
      _
    $region5: #{block_forward.9} parent=1 // pred_fallthru
      _
    // Predicated region
    $region6: #{block_forward.9} parent=1 // pred_check
      _
    $region7: #{block_forward.9} parent=1 // pred_check_branch
      %16 = sbr.rel (0) target = $region9
    $region8: #{block_forward.9} parent=1 // pred_region
      _
    $region9: #{block_forward.9} parent=1 // pred_fallthru
      _
    // Predicated region
    $region10: #{block_forward.9} parent=1 // pred_check
      _
    $region11: #{block_forward.9} parent=1 // pred_check_branch
      %18 = sbr.rel (0) target = $region13
    $region12: #{block_forward.9} parent=1 // pred_region
      _
    $region13: #{block_forward.9} parent=1 // pred_fallthru
      _
    // Predicated region
    $region14: #{block_forward.9} parent=1 // pred_check
      _
    $region15: #{block_forward.9} parent=1 // pred_check_branch
      %20 = sbr.rel (0) target = $region17
    $region16: #{block_forward.9} parent=1 // pred_region
      _
    $region17: #{block_forward.9} parent=1 // pred_fallthru
      _
    // Predicated region
    $region18: #{block_forward.9} parent=1 // pred_check
      _
    $region19: #{block_forward.9} parent=1 // pred_check_branch
      %22 = sbr.rel (0) target = $region21
    $region20: #{block_forward.9} parent=1 // pred_region
      _
    $region21: #{block_forward.9} parent=1 // pred_fallthru
      _
    // Predicated region
    $region22: #{block_forward.9} parent=1 // pred_check
      _
    $region23: #{block_forward.9} parent=1 // pred_check_branch
      %24 = sbr.rel (0) target = $region25
    $region24: #{block_forward.9} parent=1 // pred_region
      _
    $region25: #{block_forward.9} parent=1 // pred_fallthru
      _
    // Predicated region
    $region26: #{block_forward.9} parent=1 // pred_check
      _
    $region27: #{block_forward.9} parent=1 // pred_check_branch
      %26 = sbr.rel (0) target = $region29
    $region28: #{block_forward.9} parent=1 // pred_region
      _
    $region29: #{block_forward.9} parent=1 // pred_fallthru
      _
    %v28 = vld [vmem:[%s0] sm:$0xff]
    %v29 = vld [vmem:[%s0 + $0x8] sm:$0xff]
    %v30 = vld [vmem:[%s0 + $0x10] sm:$0xff]
    %v31 = vld [vmem:[%s0 + $0x18] sm:$0xff]
    %v32 = vld [vmem:[%s1] sm:$0x1]
    %v33 = vld [vmem:[%s2] sm:$0x1]
    %vm34 = vcmask 261120
    %v35 = vsel %vm34, %v28, 0.0
    %36 = vadd.xlane.f32.xlu0 %v35
    %v37 = vpop.xlane.xlu0 %36
    %v38 = vsel %vm34, %v29, 0.0
    %39 = vadd.xlane.f32.xlu0 %v38
    %v40 = vpop.xlane.xlu0 %39
    %v41 = vsel %vm34, %v30, 0.0
    %42 = vadd.xlane.f32.xlu0 %v41
    %v43 = vpop.xlane.xlu0 %42
    %v44 = vsel %vm34, %v31, 0.0
    %45 = vadd.xlane.f32.xlu0 %v44
    %v46 = vpop.xlane.xlu0 %45
    %v47 = vrcp.pop 32.0
    %v48 = vmul.f32 32.0, %v47
    %v49 = vsub.f32 1.0, %v48
    %v50 = vmul.f32 %v47, %v49
    %v51 = vadd.f32 %v47, %v50
    %vm52 = vweird.f32 %v47
    %v53 = vsel %vm52, %v47, %v51
    %v54 = vmul.f32 %v37, %v53
    %v55 = vmul.f32 %v40, %v53
    %v56 = vmul.f32 %v43, %v53
    %v57 = vmul.f32 %v46, %v53
    %v58 = vsub.f32 %v28, %v54
    %v59 = vsub.f32 %v29, %v55
    %v60 = vsub.f32 %v30, %v56
    %v61 = vsub.f32 %v31, %v57
    %v62 = vmul.f32 %v58, %v58
    %v63 = vmul.f32 %v59, %v59
    %v64 = vmul.f32 %v60, %v60
    %v65 = vmul.f32 %v61, %v61
    %v66 = vsel %vm34, %v62, 0.0
    %67 = vadd.xlane.f32.xlu0 %v66
    %v68 = vpop.xlane.xlu0 %67
    %v69 = vsel %vm34, %v63, 0.0
    %70 = vadd.xlane.f32.xlu0 %v69
    %v71 = vpop.xlane.xlu0 %70
    %v72 = vsel %vm34, %v64, 0.0
    %73 = vadd.xlane.f32.xlu0 %v72
    %v74 = vpop.xlane.xlu0 %73
    %v75 = vsel %vm34, %v65, 0.0
    %76 = vadd.xlane.f32.xlu0 %v75
    %v77 = vpop.xlane.xlu0 %76
    %v78 = vmul.f32 %v68, %v53
    %v79 = vmul.f32 %v71, %v53
    %v80 = vmul.f32 %v74, %v53
    %v81 = vmul.f32 %v77, %v53
    %v82 = vadd.f32 %v78, 1e-05
    %v83 = vadd.f32 %v79, 1e-05
    %v84 = vadd.f32 %v80, 1e-05
    %v85 = vadd.f32 %v81, 1e-05
    %v86 = vrsqrt.pop %v82
    %v87 = vmul.f32 %v86, %v82
    %v88 = vmul.f32 %v87, %v86
    %v89 = vmul.f32 0.5, %v88
    %v90 = vsub.f32 1.5, %v89
    %v91 = vmul.f32 %v86, %v90
    %vm92 = vweird.f32 %v82
    %vm93 = vweird.f32 %v86
    %vm94 = vmor %vm92, %vm93
    %v95 = vsel %vm94, %v86, %v91
    %v96 = vrsqrt.pop %v83
    %v97 = vmul.f32 %v96, %v83
    %v98 = vmul.f32 %v97, %v96
    %v99 = vmul.f32 0.5, %v98
    %v100 = vsub.f32 1.5, %v99
    %v101 = vmul.f32 %v96, %v100
    %vm102 = vweird.f32 %v83
    %vm103 = vweird.f32 %v96
    %vm104 = vmor %vm102, %vm103
    %v105 = vsel %vm104, %v96, %v101
    %v106 = vrsqrt.pop %v84
    %v107 = vmul.f32 %v106, %v84
    %v108 = vmul.f32 %v107, %v106
    %v109 = vmul.f32 0.5, %v108
    %v110 = vsub.f32 1.5, %v109
    %v111 = vmul.f32 %v106, %v110
    %vm112 = vweird.f32 %v84
    %vm113 = vweird.f32 %v106
    %vm114 = vmor %vm112, %vm113
    %v115 = vsel %vm114, %v106, %v111
    %v116 = vrsqrt.pop %v85
    %v117 = vmul.f32 %v116, %v85
    %v118 = vmul.f32 %v117, %v116
    %v119 = vmul.f32 0.5, %v118
    %v120 = vsub.f32 1.5, %v119
    %v121 = vmul.f32 %v116, %v120
    %vm122 = vweird.f32 %v85
    %vm123 = vweird.f32 %v116
    %vm124 = vmor %vm122, %vm123
    %v125 = vsel %vm124, %v116, %v121
    %v126 = vmul.f32 %v58, %v95
    %v127 = vmul.f32 %v59, %v105
    %v128 = vmul.f32 %v60, %v115
    %v129 = vmul.f32 %v61, %v125
    %v131 = vperm.slane %v32, 0
    %v133 = vmul.f32 %v126, %v131
    %v134 = vmul.f32 %v127, %v131
    %v135 = vmul.f32 %v128, %v131
    %v136 = vmul.f32 %v129, %v131
    %v138 = vperm.slane %v33, 0
    %v140 = vadd.f32 %v133, %v138
    %v141 = vadd.f32 %v134, %v138
    %v142 = vadd.f32 %v135, %v138
    %v143 = vadd.f32 %v136, %v138
    %v144 = vpack.c.bf16 %v141, %v140
    %v145 = vpack.c.bf16 %v143, %v142
    %v146 = vld [vmem:[%s3] sm:$0xf]
    %v147 = vld [vmem:[%s3 + $0x4] sm:$0xf]
    %v148 = vld [vmem:[%s3 + $0x8] sm:$0xf]
    %v149 = vld [vmem:[%s3 + $0xc] sm:$0xf]
    %v150 = vld [vmem:[%s4] sm:$0x1]
    %v152 = vperm.slane %v150, 0
    %v158 = vunpack.c.l.b16 %v146
    %v159 = vunpack.c.l.b16 %v147
    %v160 = vunpack.c.l.b16 %v148
    %v161 = vunpack.c.l.b16 %v149
    %v162 = vpack.c.b16 %v159, %v158
    %v163 = vpack.c.b16 %v161, %v160
    %v167 = vsel %vm34, %v144, 0
    %v170 = vsel %vm34, %v145, 0
    %172 = vmatpush.bf16.msra.mxu0 0
    %173 = vmatpush.bf16.msra.mxu0 0
    %174 = vmatpush.bf16.msra.mxu0 0
    %175 = vmatpush.bf16.msra.mxu0 0
    %176 = vmatpush.bf16.msra.mxu0 0
    %177 = vmatpush.bf16.msra.mxu0 0
    %178 = vmatpush.bf16.msra.mxu0 %v163
    %179 = vmatpush.bf16.msra.mxu0 %v162
    %180 = vmatmul.bf16.gmra.mxu0 %v167
    %v181 = vpop.f32.mrf.mxu0
    %v182 = vadd.f32 %v152, %v181
    %v183 = vpop.f32.mrf.mxu0
    %v184 = vadd.f32 %v152, %v183
    %185 = vmatmul.bf16.gmra.mxu0 %v170
    %v186 = vpop.f32.mrf.mxu0
    %v187 = vadd.f32 %v152, %v186
    %v188 = vpop.f32.mrf.mxu0
    %v189 = vadd.f32 %v152, %v188
    %190 = vdwg.mxu0
    %v191 = vmul.f32 %v182, 0.5
    %v192 = vmul.f32 %v184, 0.5
    %v193 = vmul.f32 %v187, 0.5
    %v194 = vmul.f32 %v189, 0.5
    %v195 = vmul.f32 %v182, 0.70710677
    %v196 = vmul.f32 %v184, 0.70710677
    %v197 = vmul.f32 %v187, 0.70710677
    %v198 = vmul.f32 %v189, 0.70710677
    %vm199 = vcmp.ge.f32.partialorder %v195, 0.0
    %vm200 = vcmp.ge.f32.partialorder %v196, 0.0
    %vm201 = vcmp.ge.f32.partialorder %v197, 0.0
    %vm202 = vcmp.ge.f32.partialorder %v198, 0.0
    %v203 = vsel %vm199, 1.0, -1.0
    %v204 = vsel %vm200, 1.0, -1.0
    %v205 = vsel %vm201, 1.0, -1.0
    %v206 = vsel %vm202, 1.0, -1.0
    %v207 = vand.u32 2147483647, %v195
    %v208 = vand.u32 2147483647, %v196
    %v209 = vand.u32 2147483647, %v197
    %v210 = vand.u32 2147483647, %v198
    %v211 = vmul.f32 %v207, 0.3275911
    %v212 = vmul.f32 %v208, 0.3275911
    %v213 = vmul.f32 %v209, 0.3275911
    %v214 = vmul.f32 %v210, 0.3275911
    %v215 = vadd.f32 %v211, 1.0
    %v216 = vadd.f32 %v212, 1.0
    %v217 = vadd.f32 %v213, 1.0
    %v218 = vadd.f32 %v214, 1.0
    %v219 = vrcp.pop %v215
    %v220 = vmul.f32 %v215, %v219
    %v221 = vsub.f32 1.0, %v220
    %v222 = vmul.f32 %v219, %v221
    %v223 = vadd.f32 %v219, %v222
    %vm224 = vweird.f32 %v215
    %vm225 = vweird.f32 %v219
    %vm226 = vmor %vm224, %vm225
    %v227 = vsel %vm226, %v219, %v223
    %v228 = vand.u32 2147483647, %v215
    %vm229 = vcmp.eq.f32.partialorder %v228, 8.507059e+37
    %v230 = vand.u32 %v215, 2147483648
    %v231 = vor.u32 1.1754944e-38, %v230
    %v232 = vsel %vm229, %v231, %v227
    %v233 = vmul.f32 1.0, %v232
    %v234 = vrcp.pop %v216
    %v235 = vmul.f32 %v216, %v234
    %v236 = vsub.f32 1.0, %v235
    %v237 = vmul.f32 %v234, %v236
    %v238 = vadd.f32 %v234, %v237
    %vm239 = vweird.f32 %v216
    %vm240 = vweird.f32 %v234
    %vm241 = vmor %vm239, %vm240
    %v242 = vsel %vm241, %v234, %v238
    %v243 = vand.u32 2147483647, %v216
    %vm244 = vcmp.eq.f32.partialorder %v243, 8.507059e+37
    %v245 = vand.u32 %v216, 2147483648
    %v246 = vor.u32 1.1754944e-38, %v245
    %v247 = vsel %vm244, %v246, %v242
    %v248 = vmul.f32 1.0, %v247
    %v249 = vrcp.pop %v217
    %v250 = vmul.f32 %v217, %v249
    %v251 = vsub.f32 1.0, %v250
    %v252 = vmul.f32 %v249, %v251
    %v253 = vadd.f32 %v249, %v252
    %vm254 = vweird.f32 %v217
    %vm255 = vweird.f32 %v249
    %vm256 = vmor %vm254, %vm255
    %v257 = vsel %vm256, %v249, %v253
    %v258 = vand.u32 2147483647, %v217
    %vm259 = vcmp.eq.f32.partialorder %v258, 8.507059e+37
    %v260 = vand.u32 %v217, 2147483648
    %v261 = vor.u32 1.1754944e-38, %v260
    %v262 = vsel %vm259, %v261, %v257
    %v263 = vmul.f32 1.0, %v262
    %v264 = vrcp.pop %v218
    %v265 = vmul.f32 %v218, %v264
    %v266 = vsub.f32 1.0, %v265
    %v267 = vmul.f32 %v264, %v266
    %v268 = vadd.f32 %v264, %v267
    %vm269 = vweird.f32 %v218
    %vm270 = vweird.f32 %v264
    %vm271 = vmor %vm269, %vm270
    %v272 = vsel %vm271, %v264, %v268
    %v273 = vand.u32 2147483647, %v218
    %vm274 = vcmp.eq.f32.partialorder %v273, 8.507059e+37
    %v275 = vand.u32 %v218, 2147483648
    %v276 = vor.u32 1.1754944e-38, %v275
    %v277 = vsel %vm274, %v276, %v272
    %v278 = vmul.f32 1.0, %v277
    %v279 = vmul.f32 %v233, 1.0614054
    %v280 = vmul.f32 %v248, 1.0614054
    %v281 = vmul.f32 %v263, 1.0614054
    %v282 = vmul.f32 %v278, 1.0614054
    %v283 = vadd.f32 %v279, -1.4531521
    %v284 = vadd.f32 %v280, -1.4531521
    %v285 = vadd.f32 %v281, -1.4531521
    %v286 = vadd.f32 %v282, -1.4531521
    %v287 = vmul.f32 %v283, %v233
    %v288 = vmul.f32 %v284, %v248
    %v289 = vmul.f32 %v285, %v263
    %v290 = vmul.f32 %v286, %v278
    %v291 = vadd.f32 %v287, 1.4214138
    %v292 = vadd.f32 %v288, 1.4214138
    %v293 = vadd.f32 %v289, 1.4214138
    %v294 = vadd.f32 %v290, 1.4214138
    %v295 = vmul.f32 %v291, %v233
    %v296 = vmul.f32 %v292, %v248
    %v297 = vmul.f32 %v293, %v263
    %v298 = vmul.f32 %v294, %v278
    %v299 = vadd.f32 %v295, -0.28449672
    %v300 = vadd.f32 %v296, -0.28449672
    %v301 = vadd.f32 %v297, -0.28449672
    %v302 = vadd.f32 %v298, -0.28449672
    %v303 = vmul.f32 %v299, %v233
    %v304 = vmul.f32 %v300, %v248
    %v305 = vmul.f32 %v301, %v263
    %v306 = vmul.f32 %v302, %v278
    %v307 = vadd.f32 %v303, 0.2548296
    %v308 = vadd.f32 %v304, 0.2548296
    %v309 = vadd.f32 %v305, 0.2548296
    %v310 = vadd.f32 %v306, 0.2548296
    %v311 = vmul.f32 %v307, %v233
    %v312 = vmul.f32 %v308, %v248
    %v313 = vmul.f32 %v309, %v263
    %v314 = vmul.f32 %v310, %v278
    %v315 = vsub.f32 0.0, %v207
    %v316 = vsub.f32 0.0, %v208
    %v317 = vsub.f32 0.0, %v209
    %v318 = vsub.f32 0.0, %v210
    %v319 = vmul.f32 %v315, %v207
    %v320 = vmul.f32 %v316, %v208
    %v321 = vmul.f32 %v317, %v209
    %v322 = vmul.f32 %v318, %v210
    %v323 = vmul.f32 %v319, 1.442695
    %v324 = vpow.pop %v323
    %v325 = vmul.f32 %v320, 1.442695
    %v326 = vpow.pop %v325
    %v327 = vmul.f32 %v321, 1.442695
    %v328 = vpow.pop %v327
    %v329 = vmul.f32 %v322, 1.442695
    %v330 = vpow.pop %v329
    %v331 = vmul.f32 %v311, %v324
    %v332 = vmul.f32 %v312, %v326
    %v333 = vmul.f32 %v313, %v328
    %v334 = vmul.f32 %v314, %v330
    %v335 = vsub.f32 1.0, %v331
    %v336 = vsub.f32 1.0, %v332
    %v337 = vsub.f32 1.0, %v333
    %v338 = vsub.f32 1.0, %v334
    %v339 = vmul.f32 %v203, %v335
    %v340 = vmul.f32 %v204, %v336
    %v341 = vmul.f32 %v205, %v337
    %v342 = vmul.f32 %v206, %v338
    %v343 = vadd.f32 %v339, 1.0
    %v344 = vadd.f32 %v340, 1.0
    %v345 = vadd.f32 %v341, 1.0
    %v346 = vadd.f32 %v342, 1.0
    %v347 = vmul.f32 %v191, %v343
    %v348 = vmul.f32 %v192, %v344
    %v349 = vmul.f32 %v193, %v345
    %v350 = vmul.f32 %v194, %v346
    %v351 = vpack.c.bf16 %v348, %v347
    %v352 = vpack.c.bf16 %v350, %v349
    %v353 = vld [vmem:[%s5] sm:$0xf]
    %v354 = vld [vmem:[%s5 + $0x4] sm:$0xf]
    %v355 = vld [vmem:[%s5 + $0x8] sm:$0xf]
    %v356 = vld [vmem:[%s5 + $0xc] sm:$0xf]
    %v357 = vld [vmem:[%s5 + $0x10] sm:$0xf]
    %v358 = vld [vmem:[%s5 + $0x14] sm:$0xf]
    %v359 = vld [vmem:[%s5 + $0x18] sm:$0xf]
    %v360 = vld [vmem:[%s5 + $0x1c] sm:$0xf]
    %v361 = vld [vmem:[%s5 + $0x20] sm:$0xf]
    %v362 = vld [vmem:[%s5 + $0x24] sm:$0xf]
    %v363 = vld [vmem:[%s5 + $0x28] sm:$0xf]
    %v364 = vld [vmem:[%s5 + $0x2c] sm:$0xf]
    %v365 = vld [vmem:[%s5 + $0x30] sm:$0xf]
    %v366 = vld [vmem:[%s5 + $0x34] sm:$0xf]
    %v367 = vld [vmem:[%s5 + $0x38] sm:$0xf]
    %v368 = vld [vmem:[%s5 + $0x3c] sm:$0xf]
    %v369 = vld [vmem:[%s6] sm:$0x1]
    %v371 = vperm.slane %v369, 0
    %v389 = vunpack.c.l.b16 %v353
    %v390 = vunpack.c.l.b16 %v354
    %v391 = vunpack.c.l.b16 %v355
    %v392 = vunpack.c.l.b16 %v356
    %v393 = vunpack.c.l.b16 %v357
    %v394 = vunpack.c.l.b16 %v358
    %v395 = vunpack.c.l.b16 %v359
    %v396 = vunpack.c.l.b16 %v360
    %v397 = vunpack.c.l.b16 %v361
    %v398 = vunpack.c.l.b16 %v362
    %v399 = vunpack.c.l.b16 %v363
    %v400 = vunpack.c.l.b16 %v364
    %v401 = vunpack.c.l.b16 %v365
    %v402 = vunpack.c.l.b16 %v366
    %v403 = vunpack.c.l.b16 %v367
    %v404 = vunpack.c.l.b16 %v368
    %v405 = vpack.c.b16 %v390, %v389
    %v406 = vpack.c.b16 %v392, %v391
    %v407 = vpack.c.b16 %v394, %v393
    %v408 = vpack.c.b16 %v396, %v395
    %v409 = vpack.c.b16 %v398, %v397
    %v410 = vpack.c.b16 %v400, %v399
    %v411 = vpack.c.b16 %v402, %v401
    %v412 = vpack.c.b16 %v404, %v403
    %421 = vmatpush.bf16.msra.mxu0 %v412
    %422 = vmatpush.bf16.msra.mxu0 %v411
    %423 = vmatpush.bf16.msra.mxu0 %v410
    %424 = vmatpush.bf16.msra.mxu0 %v409
    %425 = vmatpush.bf16.msra.mxu0 %v408
    %426 = vmatpush.bf16.msra.mxu0 %v407
    %427 = vmatpush.bf16.msra.mxu0 %v406
    %428 = vmatpush.bf16.msra.mxu0 %v405
    %429 = vmatmul.bf16.gmra.mxu0 %v351
    %v430 = vpop.f32.mrf.mxu0
    %v431 = vadd.f32 %v371, %v430
    %v432 = vpop.f32.mrf.mxu0
    %v433 = vadd.f32 %v371, %v432
    %434 = vmatmul.bf16.gmra.mxu0 %v352
    %v435 = vpop.f32.mrf.mxu0
    %v436 = vadd.f32 %v371, %v435
    %v437 = vpop.f32.mrf.mxu0
    %v438 = vadd.f32 %v371, %v437
    %439 = vdwg.mxu0
    %v440 = vadd.f32 %v28, %v431
    %v441 = vadd.f32 %v29, %v433
    %v442 = vadd.f32 %v30, %v436
    %v443 = vadd.f32 %v31, %v438
    %444 = vst.msk [vmem:[#allocation2] sm:$0xff] %vm34, %v440
    %445 = vst.msk [vmem:[#allocation2 + $0x8] sm:$0xff] %vm34, %v441
    %446 = vst.msk [vmem:[#allocation2 + $0x10] sm:$0xff] %vm34, %v442
    %447 = vst.msk [vmem:[#allocation2 + $0x18] sm:$0xff] %vm34, %v443
    // Predicated region
    $region30: #{block_forward.9} parent=1 // pred_check
      _
    $region31: #{block_forward.9} parent=1 // pred_check_branch
      %449 = sbr.rel (0) target = $region33
    $region32: #{block_forward.9} parent=1 // pred_region
      %451 = vsyncadd [#allocation3], 0
      %s452 = sshll.u32 [#allocation2], 4
      %s453 = int_to_ptr.vmem [resolvable:$true] %s452
      %s454 = sshll.u32 %s7, 4
      %s455 = int_to_ptr.hbm [resolvable:$true] %s454
      %460 = dma.vmem_to_hbm [thread:$0]  %s453, 512, %s455, [#allocation3], 128, 128, 8
    $region33: #{block_forward.9} parent=1 // pred_fallthru
      _
    // Predicated region
    $region34: #{block_forward.9} parent=1 // pred_check
      _
    $region35: #{block_forward.9} parent=1 // pred_check_branch
      %462 = sbr.rel (0) target = $region37
    $region36: #{block_forward.9} parent=1 // pred_region
      %464 = dma.done [#allocation3], 512
    $region37: #{block_forward.9} parent=1 // pred_fallthru
      _
    %465 = vsyncpa [#allocation3], 1

</llo_original>
